<compile_context>
chip_gen: v5e
topology: v5e:2x2
jax: 0.10.0
libtpu: 0.0.40
codegen_flags: <defaults>
</compile_context>

<pallas_src>
import functools

import jax
import jax.numpy as jnp
from jax import lax
from jax.experimental import pallas as pl
from jax.experimental.pallas import tpu as pltpu


# ----------------------------------------------------------------------------
# Glue: bilinear grid_sample (align_corners=False, padding_mode='zeros')
# img: [B, C, H, W], grid: [B, N, 2] with (x, y) in [-1, 1]  ->  [B, C, N]
# ----------------------------------------------------------------------------
def grid_sample_bilinear(img, grid):
    B, C, H, W = img.shape
    gx = grid[..., 0]
    gy = grid[..., 1]
    ix = ((gx + 1.0) * W - 1.0) * 0.5
    iy = ((gy + 1.0) * H - 1.0) * 0.5
    ix0 = jnp.floor(ix)
    iy0 = jnp.floor(iy)
    ix1 = ix0 + 1.0
    iy1 = iy0 + 1.0
    wx1 = ix - ix0
    wx0 = 1.0 - wx1
    wy1 = iy - iy0
    wy0 = 1.0 - wy1

    def gather(iy_f, ix_f):
        valid = (ix_f >= 0) & (ix_f <= W - 1) & (iy_f >= 0) & (iy_f <= H - 1)
        ixc = jnp.clip(ix_f, 0, W - 1).astype(jnp.int32)
        iyc = jnp.clip(iy_f, 0, H - 1).astype(jnp.int32)

        def per_batch(im, iy_b, ix_b):
            return im[:, iy_b, ix_b]                       # [C, N]

        vals = jax.vmap(per_batch)(img, iyc, ixc)          # [B, C, N]
        return vals * valid[:, None, :].astype(img.dtype)

    v00 = gather(iy0, ix0)
    v01 = gather(iy0, ix1)
    v10 = gather(iy1, ix0)
    v11 = gather(iy1, ix1)
    w00 = (wy0 * wx0)[:, None, :]
    w01 = (wy0 * wx1)[:, None, :]
    w10 = (wy1 * wx0)[:, None, :]
    w11 = (wy1 * wx1)[:, None, :]
    return v00 * w00 + v01 * w01 + v10 * w10 + v11 * w11


# ----------------------------------------------------------------------------
# Kernel 1: attention (row-block tiled) + trans_conv + per-batch BN partials
# ----------------------------------------------------------------------------
def pct_attn_kernel(img_ref,      # [1, C_img, N]
                    pts_ref,      # [1, C_pts, N]
                    wq_img_ref,   # [C_qk, C_img]
                    wq_pts_ref,   # [C_qk, C_pts]
                    wv_ref,       # [C_pts, C_pts]
                    bv_ref,       # [C_pts, 1]
                    wt_ref,       # [C_pts, C_pts]
                    bt_ref,       # [C_pts, 1]
                    t_ref,        # out [1, C_pts, N]   trans_conv output
                    tsum_ref,     # out [1, C_pts, 1]   per-batch sum_n t
                    tsumsq_ref,   # out [1, C_pts, 1]   per-batch sum_n t^2
                    q_scr,        # VMEM [C_qk, N]
                    v_scr,        # VMEM [C_pts, N]
                    numer_scr,    # VMEM [C_pts, N]
                    colsum_scr,   # VMEM [1, N]
                    *, tq):
    nb = pl.program_id(1)
    nblocks = pl.num_programs(1)

    @pl.when(nb == 0)
    def _init():
        img = img_ref[0]                                  # [C_img, N]
        pts = pts_ref[0]                                  # [C_pts, N]
        # q_conv and k_conv share their weight in PCT -> one projection,
        # computed once per batch and kept resident across row blocks.
        q_scr[...] = (
            jnp.dot(wq_img_ref[...], img, preferred_element_type=jnp.float32)
            + jnp.dot(wq_pts_ref[...], pts, preferred_element_type=jnp.float32))
        v_scr[...] = (
            jnp.dot(wv_ref[...], pts, preferred_element_type=jnp.float32)
            + bv_ref[...])
        numer_scr[...] = jnp.zeros_like(numer_scr)
        colsum_scr[...] = jnp.zeros_like(colsum_scr)

    start = pl.multiple_of(nb * tq, tq)
    q_blk = q_scr[:, pl.ds(start, tq)]                    # [C_qk, tq]

    # energy[n, m] = <q[:, block_start + n], q[:, m]>      -> [tq, N]
    energy = lax.dot_general(q_blk, q_scr[...], (((0,), (0,)), ((), ())),
                             preferred_element_type=jnp.float32)

    # row softmax (all N columns are present in this tile)
    e_max = jnp.max(energy, axis=-1, keepdims=True)
    ex = jnp.exp(energy - e_max)
    attn = ex * pl.reciprocal(jnp.sum(ex, axis=-1, keepdims=True), approx=True)

    # accumulate column sums (torch: attention.sum(dim=1)) and the numerator
    # of x_r = x_v @ attention for the rows of this block.
    colsum_scr[...] += jnp.sum(attn, axis=0, keepdims=True)        # [1, N]
    v_blk = v_scr[:, pl.ds(start, tq)]                             # [C_pts, tq]
    numer_scr[...] += jnp.dot(v_blk, attn,
                              preferred_element_type=jnp.float32)  # [C_pts, N]

    @pl.when(nb == nblocks - 1)
    def _finalize():
        pts = pts_ref[0]
        x_r = numer_scr[...] * pl.reciprocal(colsum_scr[...] + 1e-9,
                                             approx=True)
        d = pts - x_r
        t = (jnp.dot(wt_ref[...], d, preferred_element_type=jnp.float32)
             + bt_ref[...])                                        # [C_pts, N]
        t_ref[0] = t
        tsum_ref[0] = jnp.sum(t, axis=-1, keepdims=True)
        tsumsq_ref[0] = jnp.sum(t * t, axis=-1, keepdims=True)


# ----------------------------------------------------------------------------
# Kernel 2: BatchNorm (precomputed scale/shift) + ReLU + residual, lane-dense
# ----------------------------------------------------------------------------
def pct_bn_relu_kernel(t_ref,      # [1, C_pts, TN]
                       pts_ref,    # [1, C_pts, TN]
                       scale_ref,  # [C_pts, 1]
                       shift_ref,  # [C_pts, 1]
                       out_ref):   # [1, C_pts, TN]
    y = jnp.maximum(t_ref[0] * scale_ref[...] + shift_ref[...], 0.0)
    out_ref[0] = pts_ref[0] + y


def _pick_row_block(n, max_tile=128):
    """Largest divisor of n that is <= max_tile and a multiple of 8 (else n)."""
    if n <= max_tile:
        return n
    for t in range(max_tile, 7, -1):
        if n % t == 0 and t % 8 == 0:
            return t
    return n


def _pick_lane_block(n, max_tile=512):
    """Largest 128-multiple divisor of n that is <= max_tile (else n)."""
    if n <= max_tile:
        return n
    for t in range(max_tile, 127, -128):
        if n % t == 0:
            return t
    return n


# ----------------------------------------------------------------------------
# Wrapper
# ----------------------------------------------------------------------------
@jax.jit
def pct_forward(pts_img, img_feats, pts_feats, params):
    B, C_pts, N = pts_feats.shape
    C_img = img_feats.shape[1]
    wqk = params["wqk"]                                   # [C_qk, C_img + C_pts]
    C_qk = wqk.shape[0]

    # bilinear image sampling (JAX glue); no concat: wqk is split instead.
    img_pt = grid_sample_bilinear(img_feats, pts_img)     # [B, C_img, N]
    wq_img = wqk[:, :C_img]                               # [C_qk, C_img]
    wq_pts = wqk[:, C_img:]                               # [C_qk, C_pts]

    tq = _pick_row_block(N)
    n_blocks = N // tq

    flops = 2 * B * (N * (C_img + C_pts) * C_qk           # q projection
                     + N * C_pts * C_pts                  # v projection
                     + N * N * C_qk                       # energy
                     + N * N * C_pts                      # x_r numerator
                     + N * C_pts * C_pts)                 # trans_conv
    transcendentals = B * N * N
    bytes_accessed = 4 * (B * N * (C_img + 2 * C_pts)     # activations in
                          + C_qk * (C_img + C_pts) + 2 * C_pts * C_pts + 2 * C_pts
                          + B * N * C_pts + 2 * B * C_pts)  # outputs

    t, tsum, tsumsq = pl.pallas_call(
        functools.partial(pct_attn_kernel, tq=tq),
        out_shape=(
            jax.ShapeDtypeStruct((B, C_pts, N), jnp.float32),
            jax.ShapeDtypeStruct((B, C_pts, 1), jnp.float32),
            jax.ShapeDtypeStruct((B, C_pts, 1), jnp.float32),
        ),
        grid_spec=pltpu.PrefetchScalarGridSpec(
            num_scalar_prefetch=0,
            grid=(B, n_blocks),
            in_specs=[
                pl.BlockSpec((1, C_img, N), lambda b, nb: (b, 0, 0)),
                pl.BlockSpec((1, C_pts, N), lambda b, nb: (b, 0, 0)),
                pl.BlockSpec((C_qk, C_img), lambda b, nb: (0, 0)),
                pl.BlockSpec((C_qk, C_pts), lambda b, nb: (0, 0)),
                pl.BlockSpec((C_pts, C_pts), lambda b, nb: (0, 0)),
                pl.BlockSpec((C_pts, 1), lambda b, nb: (0, 0)),
                pl.BlockSpec((C_pts, C_pts), lambda b, nb: (0, 0)),
                pl.BlockSpec((C_pts, 1), lambda b, nb: (0, 0)),
            ],
            out_specs=[
                pl.BlockSpec((1, C_pts, N), lambda b, nb: (b, 0, 0)),
                pl.BlockSpec((1, C_pts, 1), lambda b, nb: (b, 0, 0)),
                pl.BlockSpec((1, C_pts, 1), lambda b, nb: (b, 0, 0)),
            ],
            scratch_shapes=[
                pltpu.VMEM((C_qk, N), jnp.float32),
                pltpu.VMEM((C_pts, N), jnp.float32),
                pltpu.VMEM((C_pts, N), jnp.float32),
                pltpu.VMEM((1, N), jnp.float32),
            ],
        ),
        compiler_params=pltpu.CompilerParams(
            dimension_semantics=("parallel", "arbitrary"),
            vmem_limit_bytes=48 * 1024 * 1024,
        ),
        cost_estimate=pl.CostEstimate(
            flops=int(flops),
            transcendentals=int(transcendentals),
            bytes_accessed=int(bytes_accessed),
        ),
    )(img_pt, pts_feats, wq_img, wq_pts,
      params["wv"], params["bv"], params["wt"], params["bt"])

    # BatchNorm1d training-mode batch statistics over (B, N) per channel,
    # computed from the per-batch partial sums (biased variance, eps=1e-5).
    count = float(B * N)
    mean = jnp.sum(tsum, axis=0).reshape(-1) / count            # [C_pts]
    ex2 = jnp.sum(tsumsq, axis=0).reshape(-1) / count
    var = jnp.maximum(ex2 - mean * mean, 0.0)
    gamma = params["gamma"].reshape(-1)
    beta = params["beta"].reshape(-1)
    inv = lax.rsqrt(var + 1e-5)
    scale = (gamma * inv).reshape(C_pts, 1)
    shift = (beta - mean * gamma * inv).reshape(C_pts, 1)

    tn = _pick_lane_block(N)
    out = pl.pallas_call(
        pct_bn_relu_kernel,
        out_shape=jax.ShapeDtypeStruct((B, C_pts, N), jnp.float32),
        grid_spec=pltpu.PrefetchScalarGridSpec(
            num_scalar_prefetch=0,
            grid=(B, N // tn),
            in_specs=[
                pl.BlockSpec((1, C_pts, tn), lambda b, j: (b, 0, j)),
                pl.BlockSpec((1, C_pts, tn), lambda b, j: (b, 0, j)),
                pl.BlockSpec((C_pts, 1), lambda b, j: (0, 0)),
                pl.BlockSpec((C_pts, 1), lambda b, j: (0, 0)),
            ],
            out_specs=pl.BlockSpec((1, C_pts, tn), lambda b, j: (b, 0, j)),
        ),
        compiler_params=pltpu.CompilerParams(
            dimension_semantics=("parallel", "parallel")),
        # The trans_conv buffer t is dead after this call; reuse it in place.
        input_output_aliases={0: 0},
    )(t, pts_feats, scale, shift)

    return out                                                   # [B, C_pts, N]


# ----------------------------------------------------------------------------
# Pure-JAX reference (PyTorch semantics) for a sanity check
# ----------------------------------------------------------------------------
def pct_reference(pts_img, img_feats, pts_feats, params):
    pts_wise = grid_sample_bilinear(img_feats, pts_img)
    fusion = jnp.concatenate([pts_wise, pts_feats], axis=1)           # [B, C_in, N]
    wqk = params["wqk"]
    wv = params["wv"]
    wt = params["wt"]
    x_q = jnp.einsum("oc,bcn->bno", wqk, fusion)                      # [B, N, C_qk]
    x_k = jnp.einsum("oc,bcn->bon", wqk, fusion)                      # [B, C_qk, N]
    x_v = jnp.einsum("oc,bcn->bon", wv, pts_feats) + params["bv"][None]
    energy = jnp.einsum("bno,bom->bnm", x_q, x_k)
    attn = jax.nn.softmax(energy, axis=-1)
    attn = attn / (1e-9 + attn.sum(axis=1, keepdims=True))
    x_r = jnp.einsum("bcn,bnm->bcm", x_v, attn)
    d = pts_feats - x_r
    t = jnp.einsum("oc,bcn->bon", wt, d) + params["bt"][None]
    mean = t.mean(axis=(0, 2), keepdims=True)
    var = ((t - mean) ** 2).mean(axis=(0, 2), keepdims=True)
    t_hat = (t - mean) / jnp.sqrt(var + 1e-5)
    x_r_bn = t_hat * params["gamma"][None] + params["beta"][None]
    return pts_feats + jnp.maximum(x_r_bn, 0.0)


# ----------------------------------------------------------------------------
def init_params(key, img_channels, pts_channels, reduction):
    in_channels = img_channels + pts_channels
    c_qk = in_channels // reduction
    k1, k2, k3, k4, k5 = jax.random.split(key, 5)

    def conv_init(k, out_c, in_c):
        bound = 1.0 / jnp.sqrt(in_c)
        return jax.random.uniform(k, (out_c, in_c), jnp.float32, -bound, bound)

    wqk = conv_init(k1, c_qk, in_channels)             # shared by q_conv / k_conv
    wv = conv_init(k2, pts_channels, pts_channels)
    bv = jax.random.uniform(k3, (pts_channels,), jnp.float32,
                            -1.0 / jnp.sqrt(pts_channels), 1.0 / jnp.sqrt(pts_channels))
    wt = conv_init(k4, pts_channels, pts_channels)
    bt = jax.random.uniform(k5, (pts_channels,), jnp.float32,
                            -1.0 / jnp.sqrt(pts_channels), 1.0 / jnp.sqrt(pts_channels))
    return {
        "wqk": wqk,                                    # [C_qk, C_in]
        "wv": wv,                                      # [C_pts, C_pts]
        "bv": bv.reshape(pts_channels, 1),
        "wt": wt,
        "bt": bt.reshape(pts_channels, 1),
        "gamma": jnp.ones((pts_channels, 1), jnp.float32),   # BatchNorm defaults
        "beta": jnp.zeros((pts_channels, 1), jnp.float32),
    }


if __name__ == "__main__":
    B, C_img, C_pts, reduction = 2, 16, 16, 4
    H = W = 16
    N = 256                                             # 2 row blocks of 128

    key = jax.random.PRNGKey(0)
    k_img, k_pts, k_grid, k_par = jax.random.split(key, 4)

    pts_img = jax.random.uniform(k_grid, (B, N, 2), jnp.float32, -1.0, 1.0)
    img_feats = jax.random.normal(k_img, (B, C_img, H, W), jnp.float32)
    pts_feats = jax.random.normal(k_pts, (B, C_pts, N), jnp.float32)
    params = init_params(k_par, C_img, C_pts, reduction)

    out = pct_forward(pts_img, img_feats, pts_feats, params)
    jax.block_until_ready(out)

    ref = pct_reference(pts_img, img_feats, pts_feats, params)
    assert out.shape == (B, C_pts, N)
    assert jnp.allclose(out, ref, atol=1e-2, rtol=1e-2), "mismatch vs reference"

    print("KERNEL_OK")
</pallas_src>

<mosaic_0001>
module attributes {stable_mosaic.version = 11 : i64} {
  func.func @pct_attn_kernel(%arg0: i32, %arg1: i32, %arg2: memref<1x16x256xf32, #tpu.memory_space<vmem>>, %arg3: memref<1x16x256xf32, #tpu.memory_space<vmem>>, %arg4: memref<8x16xf32, #tpu.memory_space<vmem>>, %arg5: memref<8x16xf32, #tpu.memory_space<vmem>>, %arg6: memref<16x16xf32, #tpu.memory_space<vmem>>, %arg7: memref<16x1xf32, #tpu.memory_space<vmem>>, %arg8: memref<16x16xf32, #tpu.memory_space<vmem>>, %arg9: memref<16x1xf32, #tpu.memory_space<vmem>>, %arg10: memref<1x16x256xf32, #tpu.memory_space<vmem>>, %arg11: memref<1x16x1xf32, #tpu.memory_space<vmem>>, %arg12: memref<1x16x1xf32, #tpu.memory_space<vmem>>, %arg13: memref<8x256xf32, #tpu.memory_space<vmem>>, %arg14: memref<16x256xf32, #tpu.memory_space<vmem>>, %arg15: memref<16x256xf32, #tpu.memory_space<vmem>>, %arg16: memref<1x256xf32, #tpu.memory_space<vmem>>) attributes {dimension_semantics = [#tpu.dimension_semantics<parallel>, #tpu.dimension_semantics<arbitrary>], iteration_bounds = array<i64: 2, 2>, scalar_prefetch = 0 : i64, scratch_operands = 4 : i64, tpu.core_type = #tpu.core_type<tc>, window_params = [{transform_indices = @transform_0, window_bounds = array<i64: 1, 16, 256>}, {transform_indices = @transform_1, window_bounds = array<i64: 1, 16, 256>}, {pipeline_mode = #tpu.pipeline_mode<synchronous>, transform_indices = @transform_2, window_bounds = array<i64: 8, 16>}, {pipeline_mode = #tpu.pipeline_mode<synchronous>, transform_indices = @transform_3, window_bounds = array<i64: 8, 16>}, {pipeline_mode = #tpu.pipeline_mode<synchronous>, transform_indices = @transform_4, window_bounds = array<i64: 16, 16>}, {pipeline_mode = #tpu.pipeline_mode<synchronous>, transform_indices = @transform_5, window_bounds = array<i64: 16, 1>}, {pipeline_mode = #tpu.pipeline_mode<synchronous>, transform_indices = @transform_6, window_bounds = array<i64: 16, 16>}, {pipeline_mode = #tpu.pipeline_mode<synchronous>, transform_indices = @transform_7, window_bounds = array<i64: 16, 1>}, {transform_indices = @transform_8, window_bounds = array<i64: 1, 16, 256>}, {transform_indices = @transform_9, window_bounds = array<i64: 1, 16, 1>}, {transform_indices = @transform_10, window_bounds = array<i64: 1, 16, 1>}]} {
    %c0_i32 = arith.constant 0 : i32
    %0 = arith.cmpi eq, %arg1, %c0_i32 : i32
    %1 = arith.extui %0 : i1 to i32
    %c0_i32_0 = arith.constant 0 : i32
    %2 = arith.cmpi ne, %1, %c0_i32_0 : i32
    scf.if %2 {
      %c0_17 = arith.constant 0 : index
      %c0_18 = arith.constant 0 : index
      %c0_19 = arith.constant 0 : index
      %33 = vector.load %arg2[%c0_17, %c0_18, %c0_19] : memref<1x16x256xf32, #tpu.memory_space<vmem>>, vector<1x16x256xf32>
      %34 = vector.shape_cast %33 : vector<1x16x256xf32> to vector<16x256xf32>
      %c0_20 = arith.constant 0 : index
      %c0_21 = arith.constant 0 : index
      %c0_22 = arith.constant 0 : index
      %35 = vector.load %arg3[%c0_20, %c0_21, %c0_22] : memref<1x16x256xf32, #tpu.memory_space<vmem>>, vector<1x16x256xf32>
      %36 = vector.shape_cast %35 : vector<1x16x256xf32> to vector<16x256xf32>
      %c0_23 = arith.constant 0 : index
      %c0_24 = arith.constant 0 : index
      %37 = vector.load %arg4[%c0_23, %c0_24] : memref<8x16xf32, #tpu.memory_space<vmem>>, vector<8x16xf32>
      %cst_25 = arith.constant dense<0.000000e+00> : vector<8x256xf32>
      %38 = tpu.matmul %37, %34, %cst_25 {dimension_numbers = #tpu.dot_dimension_numbers<[1], [0], [0], [1], [0, 0, 1, 1], [], []>} : vector<8x16xf32>, vector<16x256xf32>, vector<8x256xf32> -> vector<8x256xf32>
      %c0_26 = arith.constant 0 : index
      %c0_27 = arith.constant 0 : index
      %39 = vector.load %arg5[%c0_26, %c0_27] : memref<8x16xf32, #tpu.memory_space<vmem>>, vector<8x16xf32>
      %cst_28 = arith.constant dense<0.000000e+00> : vector<8x256xf32>
      %40 = tpu.matmul %39, %36, %cst_28 {dimension_numbers = #tpu.dot_dimension_numbers<[1], [0], [0], [1], [0, 0, 1, 1], [], []>} : vector<8x16xf32>, vector<16x256xf32>, vector<8x256xf32> -> vector<8x256xf32>
      %41 = arith.addf %38, %40 : vector<8x256xf32>
      %c0_29 = arith.constant 0 : index
      %c0_30 = arith.constant 0 : index
      %42 = vector.load %arg13[%c0_29, %c0_30] : memref<8x256xf32, #tpu.memory_space<vmem>>, vector<8x256xf32>
      tpu.vector_store %arg13[%c0_29, %c0_30], %41 {strides = array<i32>} : memref<8x256xf32, #tpu.memory_space<vmem>>, vector<8x256xf32>,
      %c0_31 = arith.constant 0 : index
      %c0_32 = arith.constant 0 : index
      %43 = vector.load %arg6[%c0_31, %c0_32] : memref<16x16xf32, #tpu.memory_space<vmem>>, vector<16x16xf32>
      %cst_33 = arith.constant dense<0.000000e+00> : vector<16x256xf32>
      %44 = tpu.matmul %43, %36, %cst_33 {dimension_numbers = #tpu.dot_dimension_numbers<[1], [0], [0], [1], [0, 0, 1, 1], [], []>} : vector<16x16xf32>, vector<16x256xf32>, vector<16x256xf32> -> vector<16x256xf32>
      %c0_34 = arith.constant 0 : index
      %c0_35 = arith.constant 0 : index
      %45 = vector.load %arg7[%c0_34, %c0_35] : memref<16x1xf32, #tpu.memory_space<vmem>>, vector<16x1xf32>
      %46 = vector.broadcast %45 : vector<16x1xf32> to vector<16x256xf32>
      %47 = arith.addf %44, %46 : vector<16x256xf32>
      %c0_36 = arith.constant 0 : index
      %c0_37 = arith.constant 0 : index
      %48 = vector.load %arg14[%c0_36, %c0_37] : memref<16x256xf32, #tpu.memory_space<vmem>>, vector<16x256xf32>
      tpu.vector_store %arg14[%c0_36, %c0_37], %47 {strides = array<i32>} : memref<16x256xf32, #tpu.memory_space<vmem>>, vector<16x256xf32>,
      %cst_38 = arith.constant 0.000000e+00 : f32
      %49 = vector.broadcast %cst_38 : f32 to vector<16x256xf32>
      %c0_39 = arith.constant 0 : index
      %c0_40 = arith.constant 0 : index
      %50 = vector.load %arg15[%c0_39, %c0_40] : memref<16x256xf32, #tpu.memory_space<vmem>>, vector<16x256xf32>
      tpu.vector_store %arg15[%c0_39, %c0_40], %49 {strides = array<i32>} : memref<16x256xf32, #tpu.memory_space<vmem>>, vector<16x256xf32>,
      %cst_41 = arith.constant 0.000000e+00 : f32
      %51 = vector.broadcast %cst_41 : f32 to vector<1x256xf32>
      %c0_42 = arith.constant 0 : index
      %c0_43 = arith.constant 0 : index
      %52 = vector.load %arg16[%c0_42, %c0_43] : memref<1x256xf32, #tpu.memory_space<vmem>>, vector<1x256xf32>
      tpu.vector_store %arg16[%c0_42, %c0_43], %51 {strides = array<i32>} : memref<1x256xf32, #tpu.memory_space<vmem>>, vector<1x256xf32>,
    } else {
    }
    %c128_i32 = arith.constant 128 : i32
    %3 = arith.muli %arg1, %c128_i32 : i32
    %4 = tpu.assume_multiple %3, 128 : i32
    %c0 = arith.constant 0 : index
    %5 = arith.index_cast %4 : i32 to index
    %6 = vector.load %arg13[%c0, %5] : memref<8x256xf32, #tpu.memory_space<vmem>>, vector<8x128xf32>
    %c0_1 = arith.constant 0 : index
    %c0_2 = arith.constant 0 : index
    %7 = vector.load %arg13[%c0_1, %c0_2] : memref<8x256xf32, #tpu.memory_space<vmem>>, vector<8x256xf32>
    %cst = arith.constant dense<0.000000e+00> : vector<128x256xf32>
    %8 = tpu.matmul %6, %7, %cst {dimension_numbers = #tpu.dot_dimension_numbers<[0], [0], [1], [1], [0, 1, 1, 1], [], []>} : vector<8x128xf32>, vector<8x256xf32>, vector<128x256xf32> -> vector<128x256xf32>
    %cst_3 = arith.constant dense<0xFF800000> : vector<128xf32>
    %9 = vector.multi_reduction <maximumf>, %8, %cst_3 [1] : vector<128x256xf32> to vector<128xf32>
    %10 = vector.shape_cast %9 : vector<128xf32> to vector<128x1xf32>
    %11 = vector.broadcast %10 : vector<128x1xf32> to vector<128x256xf32>
    %12 = arith.subf %8, %11 : vector<128x256xf32>
    %13 = math.exp %12 : vector<128x256xf32>
    %cst_4 = arith.constant dense<0.000000e+00> : vector<128xf32>
    %14 = vector.multi_reduction <add>, %13, %cst_4 [1] : vector<128x256xf32> to vector<128xf32>
    %15 = vector.shape_cast %14 : vector<128xf32> to vector<128x1xf32>
    %16 = tpu.reciprocal %15 {approx = true} : vector<128x1xf32> -> vector<128x1xf32>
    %17 = vector.broadcast %16 : vector<128x1xf32> to vector<128x256xf32>
    %18 = arith.mulf %13, %17 : vector<128x256xf32>
    %c0_5 = arith.constant 0 : index
    %c0_6 = arith.constant 0 : index
    %19 = vector.load %arg16[%c0_5, %c0_6] : memref<1x256xf32, #tpu.memory_space<vmem>>, vector<1x256xf32>
    %cst_7 = arith.constant dense<0.000000e+00> : vector<256xf32>
    %20 = vector.multi_reduction <add>, %18, %cst_7 [0] : vector<128x256xf32> to vector<256xf32>
    %21 = vector.shape_cast %20 : vector<256xf32> to vector<1x256xf32>
    %22 = arith.addf %19, %21 : vector<1x256xf32>
    %c0_8 = arith.constant 0 : index
    %c0_9 = arith.constant 0 : index
    %23 = vector.load %arg16[%c0_8, %c0_9] : memref<1x256xf32, #tpu.memory_space<vmem>>, vector<1x256xf32>
    tpu.vector_store %arg16[%c0_8, %c0_9], %22 {strides = array<i32>} : memref<1x256xf32, #tpu.memory_space<vmem>>, vector<1x256xf32>,
    %c0_10 = arith.constant 0 : index
    %24 = arith.index_cast %4 : i32 to index
    %25 = vector.load %arg14[%c0_10, %24] : memref<16x256xf32, #tpu.memory_space<vmem>>, vector<16x128xf32>
    %c0_11 = arith.constant 0 : index
    %c0_12 = arith.constant 0 : index
    %26 = vector.load %arg15[%c0_11, %c0_12] : memref<16x256xf32, #tpu.memory_space<vmem>>, vector<16x256xf32>
    %cst_13 = arith.constant dense<0.000000e+00> : vector<16x256xf32>
    %27 = tpu.matmul %25, %18, %cst_13 {dimension_numbers = #tpu.dot_dimension_numbers<[1], [0], [0], [1], [0, 0, 1, 1], [], []>} : vector<16x128xf32>, vector<128x256xf32>, vector<16x256xf32> -> vector<16x256xf32>
    %28 = arith.addf %26, %27 : vector<16x256xf32>
    %c0_14 = arith.constant 0 : index
    %c0_15 = arith.constant 0 : index
    %29 = vector.load %arg15[%c0_14, %c0_15] : memref<16x256xf32, #tpu.memory_space<vmem>>, vector<16x256xf32>
    tpu.vector_store %arg15[%c0_14, %c0_15], %28 {strides = array<i32>} : memref<16x256xf32, #tpu.memory_space<vmem>>, vector<16x256xf32>,
    %c1_i32 = arith.constant 1 : i32
    %30 = arith.cmpi eq, %arg1, %c1_i32 : i32
    %31 = arith.extui %30 : i1 to i32
    %c0_i32_16 = arith.constant 0 : i32
    %32 = arith.cmpi ne, %31, %c0_i32_16 : i32
    scf.if %32 {
      %c0_17 = arith.constant 0 : index
      %c0_18 = arith.constant 0 : index
      %c0_19 = arith.constant 0 : index
      %33 = vector.load %arg3[%c0_17, %c0_18, %c0_19] : memref<1x16x256xf32, #tpu.memory_space<vmem>>, vector<1x16x256xf32>
      %34 = vector.shape_cast %33 : vector<1x16x256xf32> to vector<16x256xf32>
      %c0_20 = arith.constant 0 : index
      %c0_21 = arith.constant 0 : index
      %35 = vector.load %arg15[%c0_20, %c0_21] : memref<16x256xf32, #tpu.memory_space<vmem>>, vector<16x256xf32>
      %c0_22 = arith.constant 0 : index
      %c0_23 = arith.constant 0 : index
      %36 = vector.load %arg16[%c0_22, %c0_23] : memref<1x256xf32, #tpu.memory_space<vmem>>, vector<1x256xf32>
      %cst_24 = arith.constant 9.99999971E-10 : f32
      %37 = vector.broadcast %cst_24 : f32 to vector<1x256xf32>
      %38 = arith.addf %36, %37 : vector<1x256xf32>
      %39 = tpu.reciprocal %38 {approx = true} : vector<1x256xf32> -> vector<1x256xf32>
      %40 = vector.broadcast %39 : vector<1x256xf32> to vector<16x256xf32>
      %41 = arith.mulf %35, %40 : vector<16x256xf32>
      %42 = arith.subf %34, %41 : vector<16x256xf32>
      %c0_25 = arith.constant 0 : index
      %c0_26 = arith.constant 0 : index
      %43 = vector.load %arg8[%c0_25, %c0_26] : memref<16x16xf32, #tpu.memory_space<vmem>>, vector<16x16xf32>
      %cst_27 = arith.constant dense<0.000000e+00> : vector<16x256xf32>
      %44 = tpu.matmul %43, %42, %cst_27 {dimension_numbers = #tpu.dot_dimension_numbers<[1], [0], [0], [1], [0, 0, 1, 1], [], []>} : vector<16x16xf32>, vector<16x256xf32>, vector<16x256xf32> -> vector<16x256xf32>
      %c0_28 = arith.constant 0 : index
      %c0_29 = arith.constant 0 : index
      %45 = vector.load %arg9[%c0_28, %c0_29] : memref<16x1xf32, #tpu.memory_space<vmem>>, vector<16x1xf32>
      %46 = vector.broadcast %45 : vector<16x1xf32> to vector<16x256xf32>
      %47 = arith.addf %44, %46 : vector<16x256xf32>
      %c0_30 = arith.constant 0 : index
      %c0_31 = arith.constant 0 : index
      %c0_32 = arith.constant 0 : index
      %48 = vector.load %arg10[%c0_30, %c0_31, %c0_32] : memref<1x16x256xf32, #tpu.memory_space<vmem>>, vector<1x16x256xf32>
      %49 = vector.shape_cast %48 : vector<1x16x256xf32> to vector<16x256xf32>
      %50 = vector.shape_cast %47 : vector<16x256xf32> to vector<1x16x256xf32>
      tpu.vector_store %arg10[%c0_30, %c0_31, %c0_32], %50 {strides = array<i32>} : memref<1x16x256xf32, #tpu.memory_space<vmem>>, vector<1x16x256xf32>,
      %cst_33 = arith.constant dense<0.000000e+00> : vector<16xf32>
      %51 = vector.multi_reduction <add>, %47, %cst_33 [1] : vector<16x256xf32> to vector<16xf32>
      %52 = vector.shape_cast %51 : vector<16xf32> to vector<16x1xf32>
      %c0_34 = arith.constant 0 : index
      %c0_35 = arith.constant 0 : index
      %c0_36 = arith.constant 0 : index
      %53 = vector.load %arg11[%c0_34, %c0_35, %c0_36] : memref<1x16x1xf32, #tpu.memory_space<vmem>>, vector<1x16x1xf32>
      %54 = vector.shape_cast %53 : vector<1x16x1xf32> to vector<16x1xf32>
      %55 = vector.shape_cast %52 : vector<16x1xf32> to vector<1x16x1xf32>
      tpu.vector_store %arg11[%c0_34, %c0_35, %c0_36], %55 {strides = array<i32>} : memref<1x16x1xf32, #tpu.memory_space<vmem>>, vector<1x16x1xf32>,
      %56 = arith.mulf %47, %47 : vector<16x256xf32>
      %cst_37 = arith.constant dense<0.000000e+00> : vector<16xf32>
      %57 = vector.multi_reduction <add>, %56, %cst_37 [1] : vector<16x256xf32> to vector<16xf32>
      %58 = vector.shape_cast %57 : vector<16xf32> to vector<16x1xf32>
      %c0_38 = arith.constant 0 : index
      %c0_39 = arith.constant 0 : index
      %c0_40 = arith.constant 0 : index
      %59 = vector.load %arg12[%c0_38, %c0_39, %c0_40] : memref<1x16x1xf32, #tpu.memory_space<vmem>>, vector<1x16x1xf32>
      %60 = vector.shape_cast %59 : vector<1x16x1xf32> to vector<16x1xf32>
      %61 = vector.shape_cast %58 : vector<16x1xf32> to vector<1x16x1xf32>
      tpu.vector_store %arg12[%c0_38, %c0_39, %c0_40], %61 {strides = array<i32>} : memref<1x16x1xf32, #tpu.memory_space<vmem>>, vector<1x16x1xf32>,
    } else {
    }
    return
  }
  func.func @transform_0(%arg0: i32, %arg1: i32) -> (i32, i32, i32) {
    %c0_i32 = arith.constant 0 : i32
    %c0_i32_0 = arith.constant 0 : i32
    %c0_i32_1 = arith.constant 0 : i32
    return %arg0, %c0_i32, %c0_i32_0 : i32, i32, i32
  }
  func.func @transform_1(%arg0: i32, %arg1: i32) -> (i32, i32, i32) {
    %c0_i32 = arith.constant 0 : i32
    %c0_i32_0 = arith.constant 0 : i32
    %c0_i32_1 = arith.constant 0 : i32
    return %arg0, %c0_i32, %c0_i32_0 : i32, i32, i32
  }
  func.func @transform_2(%arg0: i32, %arg1: i32) -> (i32, i32) {
    %c0_i32 = arith.constant 0 : i32
    %c0_i32_0 = arith.constant 0 : i32
    %c0_i32_1 = arith.constant 0 : i32
    return %c0_i32, %c0_i32_0 : i32, i32
  }
  func.func @transform_3(%arg0: i32, %arg1: i32) -> (i32, i32) {
    %c0_i32 = arith.constant 0 : i32
    %c0_i32_0 = arith.constant 0 : i32
    %c0_i32_1 = arith.constant 0 : i32
    return %c0_i32, %c0_i32_0 : i32, i32
  }
  func.func @transform_4(%arg0: i32, %arg1: i32) -> (i32, i32) {
    %c0_i32 = arith.constant 0 : i32
    %c0_i32_0 = arith.constant 0 : i32
    %c0_i32_1 = arith.constant 0 : i32
    return %c0_i32, %c0_i32_0 : i32, i32
  }
  func.func @transform_5(%arg0: i32, %arg1: i32) -> (i32, i32) {
    %c0_i32 = arith.constant 0 : i32
    %c0_i32_0 = arith.constant 0 : i32
    %c0_i32_1 = arith.constant 0 : i32
    return %c0_i32, %c0_i32_0 : i32, i32
  }
  func.func @transform_6(%arg0: i32, %arg1: i32) -> (i32, i32) {
    %c0_i32 = arith.constant 0 : i32
    %c0_i32_0 = arith.constant 0 : i32
    %c0_i32_1 = arith.constant 0 : i32
    return %c0_i32, %c0_i32_0 : i32, i32
  }
  func.func @transform_7(%arg0: i32, %arg1: i32) -> (i32, i32) {
    %c0_i32 = arith.constant 0 : i32
    %c0_i32_0 = arith.constant 0 : i32
    %c0_i32_1 = arith.constant 0 : i32
    return %c0_i32, %c0_i32_0 : i32, i32
  }
  func.func @transform_8(%arg0: i32, %arg1: i32) -> (i32, i32, i32) {
    %c0_i32 = arith.constant 0 : i32
    %c0_i32_0 = arith.constant 0 : i32
    %c0_i32_1 = arith.constant 0 : i32
    return %arg0, %c0_i32, %c0_i32_0 : i32, i32, i32
  }
  func.func @transform_9(%arg0: i32, %arg1: i32) -> (i32, i32, i32) {
    %c0_i32 = arith.constant 0 : i32
    %c0_i32_0 = arith.constant 0 : i32
    %c0_i32_1 = arith.constant 0 : i32
    return %arg0, %c0_i32, %c0_i32_0 : i32, i32, i32
  }
  func.func @transform_10(%arg0: i32, %arg1: i32) -> (i32, i32, i32) {
    %c0_i32 = arith.constant 0 : i32
    %c0_i32_0 = arith.constant 0 : i32
    %c0_i32_1 = arith.constant 0 : i32
    return %arg0, %c0_i32, %c0_i32_0 : i32, i32, i32
  }
}

module attributes {stable_mosaic.version = 11 : i64} {
  func.func @pct_bn_relu_kernel(%arg0: i32, %arg1: i32, %arg2: memref<1x16x256xf32, #tpu.memory_space<vmem>>, %arg3: memref<1x16x256xf32, #tpu.memory_space<vmem>>, %arg4: memref<16x1xf32, #tpu.memory_space<vmem>>, %arg5: memref<16x1xf32, #tpu.memory_space<vmem>>, %arg6: memref<1x16x256xf32, #tpu.memory_space<vmem>>) attributes {dimension_semantics = [#tpu.dimension_semantics<parallel>, #tpu.dimension_semantics<parallel>], iteration_bounds = array<i64: 2, 1>, scalar_prefetch = 0 : i64, scratch_operands = 0 : i64, tpu.core_type = #tpu.core_type<tc>, window_params = [{transform_indices = @transform_0, window_bounds = array<i64: 1, 16, 256>}, {transform_indices = @transform_1, window_bounds = array<i64: 1, 16, 256>}, {pipeline_mode = #tpu.pipeline_mode<synchronous>, transform_indices = @transform_2, window_bounds = array<i64: 16, 1>}, {pipeline_mode = #tpu.pipeline_mode<synchronous>, transform_indices = @transform_3, window_bounds = array<i64: 16, 1>}, {transform_indices = @transform_4, window_bounds = array<i64: 1, 16, 256>}]} {
    %c0 = arith.constant 0 : index
    %c0_0 = arith.constant 0 : index
    %c0_1 = arith.constant 0 : index
    %0 = vector.load %arg2[%c0, %c0_0, %c0_1] : memref<1x16x256xf32, #tpu.memory_space<vmem>>, vector<1x16x256xf32>
    %1 = vector.shape_cast %0 : vector<1x16x256xf32> to vector<16x256xf32>
    %c0_2 = arith.constant 0 : index
    %c0_3 = arith.constant 0 : index
    %2 = vector.load %arg4[%c0_2, %c0_3] : memref<16x1xf32, #tpu.memory_space<vmem>>, vector<16x1xf32>
    %3 = vector.broadcast %2 : vector<16x1xf32> to vector<16x256xf32>
    %4 = arith.mulf %1, %3 : vector<16x256xf32>
    %c0_4 = arith.constant 0 : index
    %c0_5 = arith.constant 0 : index
    %5 = vector.load %arg5[%c0_4, %c0_5] : memref<16x1xf32, #tpu.memory_space<vmem>>, vector<16x1xf32>
    %6 = vector.broadcast %5 : vector<16x1xf32> to vector<16x256xf32>
    %7 = arith.addf %4, %6 : vector<16x256xf32>
    %cst = arith.constant 0.000000e+00 : f32
    %8 = vector.broadcast %cst : f32 to vector<16x256xf32>
    %9 = arith.maximumf %7, %8 : vector<16x256xf32>
    %c0_6 = arith.constant 0 : index
    %c0_7 = arith.constant 0 : index
    %c0_8 = arith.constant 0 : index
    %10 = vector.load %arg3[%c0_6, %c0_7, %c0_8] : memref<1x16x256xf32, #tpu.memory_space<vmem>>, vector<1x16x256xf32>
    %11 = vector.shape_cast %10 : vector<1x16x256xf32> to vector<16x256xf32>
    %12 = arith.addf %11, %9 : vector<16x256xf32>
    %c0_9 = arith.constant 0 : index
    %c0_10 = arith.constant 0 : index
    %c0_11 = arith.constant 0 : index
    %13 = vector.load %arg6[%c0_9, %c0_10, %c0_11] : memref<1x16x256xf32, #tpu.memory_space<vmem>>, vector<1x16x256xf32>
    %14 = vector.shape_cast %13 : vector<1x16x256xf32> to vector<16x256xf32>
    %15 = vector.shape_cast %12 : vector<16x256xf32> to vector<1x16x256xf32>
    tpu.vector_store %arg6[%c0_9, %c0_10, %c0_11], %15 {strides = array<i32>} : memref<1x16x256xf32, #tpu.memory_space<vmem>>, vector<1x16x256xf32>,
    return
  }
  func.func @transform_0(%arg0: i32, %arg1: i32) -> (i32, i32, i32) {
    %c0_i32 = arith.constant 0 : i32
    %c0_i32_0 = arith.constant 0 : i32
    return %arg0, %c0_i32, %arg1 : i32, i32, i32
  }
  func.func @transform_1(%arg0: i32, %arg1: i32) -> (i32, i32, i32) {
    %c0_i32 = arith.constant 0 : i32
    %c0_i32_0 = arith.constant 0 : i32
    return %arg0, %c0_i32, %arg1 : i32, i32, i32
  }
  func.func @transform_2(%arg0: i32, %arg1: i32) -> (i32, i32) {
    %c0_i32 = arith.constant 0 : i32
    %c0_i32_0 = arith.constant 0 : i32
    %c0_i32_1 = arith.constant 0 : i32
    return %c0_i32, %c0_i32_0 : i32, i32
  }
  func.func @transform_3(%arg0: i32, %arg1: i32) -> (i32, i32) {
    %c0_i32 = arith.constant 0 : i32
    %c0_i32_0 = arith.constant 0 : i32
    %c0_i32_1 = arith.constant 0 : i32
    return %c0_i32, %c0_i32_0 : i32, i32
  }
  func.func @transform_4(%arg0: i32, %arg1: i32) -> (i32, i32, i32) {
    %c0_i32 = arith.constant 0 : i32
    %c0_i32_0 = arith.constant 0 : i32
    return %arg0, %c0_i32, %arg1 : i32, i32, i32
  }
}

</mosaic_0001>

<llo_original>
// kernel: pct_forward.3
$region0: #{pct_forward.3}
  #allocation0 [shape = 'u32[]', space=smem, size = 0x4, offset = 0x4, fixed_abs, tag = 'smem constant byte address 0x4 - core index']
  #allocation1 [shape = 'u32[72,128]{1,0:T(1,128)}', space=vmem, size = 0x9000, scoped, tag = 'internal scratch']
  %s0 = inlined_call_operand.hbm [shape: f32[2,16,256], index: 0, kind: input, shape index: {}, may-alias: {0,4}]
  %s1 = inlined_call_operand.vmem [shape: f32[2,16,256], index: 1, kind: input, shape index: {}]
  %s2 = inlined_call_operand.vmem [shape: f32[16,1], index: 2, kind: input, shape index: {}]
  %s3 = inlined_call_operand.vmem [shape: f32[16,1], index: 3, kind: input, shape index: {}]
  %s4 = inlined_call_operand.hbm [shape: f32[2,16,256], index: 4, kind: output, shape index: {}, may-alias: {0,4}]
  %s5 = sld [smem:[#allocation0]]
  $region53: #{pct_forward.3} parent=0
    _
  %s7 = ssub.s32 1, %s5
  %s8 = scalar_select 0, %s7, %s5
  $region1: #{pct_forward.3} parent=0
    #allocation2 [shape = 'u8[32768]{0}', space=vmem, size = 0x8000, scoped, tag = 'input window, operand 0']
    #allocation3 [shape = 's32[2]{0}', space=sflag, size = 0x8, scoped, tag = 'scoped memory for pct_forward.3']
    #allocation4 [shape = 's32[2]{0}', space=sflag, size = 0x8, scoped, tag = 'scoped memory for pct_forward.3']
    #allocation5 [shape = 'u8[32768]{0}', space=vmem, size = 0x8000, scoped, tag = 'output window, operand 0']
    %9 = vsyncpa [#allocation3], 0
    %s10 = scalar_lea.sflag [#allocation3], 1
    %11 = vsyncpa %s10, 0
    %12 = vsyncpa [#allocation4], 0
    %s13 = scalar_lea.sflag [#allocation4], 1
    %14 = vsyncpa %s13, 0
    loop: start=0, step=1, limit=4
    $region2: #{pct_forward.3} parent=1 // loop_pre_header
      _
    $region3: #{pct_forward.3} parent=1 // loop_header
      %s16 = sphi 0, %s20
      %p17 = scmp.ge.s32.totalorder %s16, 4
      %s23 = sphi 0, %s35
      %s24 = sphi 0, %s31
      %s25 = sphi 0, %s23
      %s26 = sphi 0, %s24
      %s27 = sphi 0, %s25
      %s28 = sphi 0, %s26
      %s40 = sphi 0, %s42
      %s43 = sphi 0, %s40
      %s44 = sphi 0, %s43
      %s60 = sphi 0, %s44
      %s68 = sphi 0, %s70
      %s71 = sphi 0, %s68
      %s72 = sphi 0, %s71
      %s88 = sphi 0, %s72
      %s92 = sphi 0, %s92
      %s94 = sphi 0, %s92
      %s95 = sphi 0, %s94
      %s109 = sphi 0, %s95
      %s113 = sphi 0, %s113
      %s115 = sphi 0, %s113
      %s116 = sphi 0, %s115
      %s130 = sphi 0, %s116
      %s138 = sphi 0, %s140
      %s141 = sphi 0, %s138
      %s142 = sphi 0, %s141
      %s158 = sphi 0, %s142
    $region4: #{pct_forward.3} parent=1 // loop_header_branch
      %19 = sbr.rel (%p17) target = $region8
    $region5: #{pct_forward.3} parent=1 // loop_body
      %s21 = ssub.s32 %s16, 1
      %s22 = ssub.s32 %s16, 2
      %s29 = sadd.s32 1, %s24
      %p30 = scmp.ge.s32.totalorder %s29, 1
      %s31 = scalar_select %p30, 0, %s29
      %s32 = sadd.s32 1, %s23
      %s33 = scalar_select %p30, %s32, %s23
      %p34 = scmp.ge.s32.totalorder %s33, 2
      %s35 = scalar_select %p34, 0, %s33
      %s36 = ssub.s32 %s23, %s35
      %s37 = ssub.s32 %s24, %s31
      %s38 = sor.u32 %s36, %s37
      %p39 = scmp.eq.s32.totalorder %s38, 0
      %s41 = sadd.s32 %s40, 1
      %s42 = scalar_select %p39, %s40, %s41
      %p45 = pneg %p39
      %p46 = scmp.eq.s32.totalorder %s16, 1
      %p47 = por %p45, %p46
      %p48 = scmp.ne.s32.totalorder %s40, %s43
      %p49 = scmp.eq.s32.totalorder %s16, 0
      %p50 = por %p48, %p49
      %p51 = scmp.ne.s32.totalorder %s40, %s43
      %p52 = scmp.eq.s32.totalorder %s21, 1
      %p53 = por %p51, %p52
      %p54 = scmp.ne.s32.totalorder %s43, %s44
      %p55 = scmp.eq.s32.totalorder %s21, 0
      %p56 = por %p54, %p55
      %p57 = scmp.ne.s32.totalorder %s43, %s44
      %p58 = scmp.eq.s32.totalorder %s22, 1
      %p59 = por %p57, %p58
      %p61 = scmp.ne.s32.totalorder %s44, %s60
      %p62 = scmp.eq.s32.totalorder %s22, 0
      %p63 = por %p61, %p62
      %s64 = ssub.s32 %s23, %s35
      %s65 = ssub.s32 %s24, %s31
      %s66 = sor.u32 %s64, %s65
      %p67 = scmp.eq.s32.totalorder %s66, 0
      %s69 = sadd.s32 %s68, 1
      %s70 = scalar_select %p67, %s68, %s69
      %p73 = pneg %p67
      %p74 = scmp.eq.s32.totalorder %s16, 1
      %p75 = por %p73, %p74
      %p76 = scmp.ne.s32.totalorder %s68, %s71
      %p77 = scmp.eq.s32.totalorder %s16, 0
      %p78 = por %p76, %p77
      %p79 = scmp.ne.s32.totalorder %s68, %s71
      %p80 = scmp.eq.s32.totalorder %s21, 1
      %p81 = por %p79, %p80
      %p82 = scmp.ne.s32.totalorder %s71, %s72
      %p83 = scmp.eq.s32.totalorder %s21, 0
      %p84 = por %p82, %p83
      %p85 = scmp.ne.s32.totalorder %s71, %s72
      %p86 = scmp.eq.s32.totalorder %s22, 1
      %p87 = por %p85, %p86
      %p89 = scmp.ne.s32.totalorder %s72, %s88
      %p90 = scmp.eq.s32.totalorder %s22, 0
      %p91 = por %p89, %p90
      %s93 = sadd.s32 %s92, 1
      %p96 = scmp.eq.s32.totalorder %s16, 1
      %p97 = scmp.ne.s32.totalorder %s92, %s94
      %p98 = scmp.eq.s32.totalorder %s16, 0
      %p99 = por %p97, %p98
      %p100 = scmp.ne.s32.totalorder %s92, %s94
      %p101 = scmp.eq.s32.totalorder %s21, 1
      %p102 = por %p100, %p101
      %p103 = scmp.ne.s32.totalorder %s94, %s95
      %p104 = scmp.eq.s32.totalorder %s21, 0
      %p105 = por %p103, %p104
      %p106 = scmp.ne.s32.totalorder %s94, %s95
      %p107 = scmp.eq.s32.totalorder %s22, 1
      %p108 = por %p106, %p107
      %p110 = scmp.ne.s32.totalorder %s95, %s109
      %p111 = scmp.eq.s32.totalorder %s22, 0
      %p112 = por %p110, %p111
      %s114 = sadd.s32 %s113, 1
      %p117 = scmp.eq.s32.totalorder %s16, 1
      %p118 = scmp.ne.s32.totalorder %s113, %s115
      %p119 = scmp.eq.s32.totalorder %s16, 0
      %p120 = por %p118, %p119
      %p121 = scmp.ne.s32.totalorder %s113, %s115
      %p122 = scmp.eq.s32.totalorder %s21, 1
      %p123 = por %p121, %p122
      %p124 = scmp.ne.s32.totalorder %s115, %s116
      %p125 = scmp.eq.s32.totalorder %s21, 0
      %p126 = por %p124, %p125
      %p127 = scmp.ne.s32.totalorder %s115, %s116
      %p128 = scmp.eq.s32.totalorder %s22, 1
      %p129 = por %p127, %p128
      %p131 = scmp.ne.s32.totalorder %s116, %s130
      %p132 = scmp.eq.s32.totalorder %s22, 0
      %p133 = por %p131, %p132
      %s134 = ssub.s32 %s23, %s35
      %s135 = ssub.s32 %s24, %s31
      %s136 = sor.u32 %s134, %s135
      %p137 = scmp.eq.s32.totalorder %s136, 0
      %s139 = sadd.s32 %s138, 1
      %s140 = scalar_select %p137, %s138, %s139
      %p143 = pneg %p137
      %p144 = scmp.eq.s32.totalorder %s16, 1
      %p145 = por %p143, %p144
      %p146 = scmp.ne.s32.totalorder %s138, %s141
      %p147 = scmp.eq.s32.totalorder %s16, 0
      %p148 = por %p146, %p147
      %p149 = scmp.ne.s32.totalorder %s138, %s141
      %p150 = scmp.eq.s32.totalorder %s21, 1
      %p151 = por %p149, %p150
      %p152 = scmp.ne.s32.totalorder %s141, %s142
      %p153 = scmp.eq.s32.totalorder %s21, 0
      %p154 = por %p152, %p153
      %p155 = scmp.ne.s32.totalorder %s141, %s142
      %p156 = scmp.eq.s32.totalorder %s22, 1
      %p157 = por %p155, %p156
      %p159 = scmp.ne.s32.totalorder %s142, %s158
      %p160 = scmp.eq.s32.totalorder %s22, 0
      %p161 = por %p159, %p160
      %p162 = scmp.le.s32.totalorder 1, %s16
      %p163 = scmp.lt.s32.totalorder %s16, 3
      %p164 = pnand %p162, %p163
      %p165 = pneg %p164
      // Predicated region
      $region9: #{pct_forward.3} parent=5 // pred_check
        _
      $region10: #{pct_forward.3} parent=5 // pred_check_branch
        %167 = sbr.rel (%p164) target = $region12
      $region11: #{pct_forward.3} parent=5 // pred_region
        %s168 = ssub.s32 %s16, 1
        // Predicated region
        $region13: #{pct_forward.3} parent=11 // pred_check
          %p169 = pneg %p105
        $region14: #{pct_forward.3} parent=11 // pred_check_branch
          %171 = sbr.rel (%p169) target = $region16
        $region15: #{pct_forward.3} parent=11 // pred_region
          _
        $region16: #{pct_forward.3} parent=11 // pred_fallthru
          _
        // Predicated region
        $region17: #{pct_forward.3} parent=11 // pred_check
          %p172 = pneg %p126
        $region18: #{pct_forward.3} parent=11 // pred_check_branch
          %174 = sbr.rel (%p172) target = $region20
        $region19: #{pct_forward.3} parent=11 // pred_region
          _
        $region20: #{pct_forward.3} parent=11 // pred_fallthru
          _
      $region12: #{pct_forward.3} parent=5 // pred_fallthru
        _
      %p175 = scmp.lt.s32.totalorder %s16, 2
      // Predicated region
      $region21: #{pct_forward.3} parent=5 // pred_check
        %p176 = pneg %p175
      $region22: #{pct_forward.3} parent=5 // pred_check_branch
        %178 = sbr.rel (%p176) target = $region24
      $region23: #{pct_forward.3} parent=5 // pred_region
        // Predicated region
        $region25: #{pct_forward.3} parent=23 // pred_check
          %p179 = pneg %p50
        $region26: #{pct_forward.3} parent=23 // pred_check_branch
          %181 = sbr.rel (%p179) target = $region28
        $region27: #{pct_forward.3} parent=23 // pred_region
          %s182 = sand.u32 %s40, 1
          %s183 = scalar_lea.sflag [#allocation3], %s182
          %s184 = sand.u32 %s40, 1
          %s185 = smul.addr %s184, 32
          %s186 = scalar_lea.vmem [#allocation2], %s185
          %s187 = smul.u32 2, %s24
          %189 = vsyncadd %s183, 0
          %s190 = smul.addr %s23, 4
          %s191 = sadd.s32 %s187, %s190
          %s192 = smul.addr %s191, 8
          %s193 = scalar_lea.hbm %s0, %s192
          %s194 = sshll.u32 %s193, 4
          %s195 = int_to_ptr.hbm [resolvable:$true] %s194
          %s196 = sshll.u32 %s186, 4
          %s197 = int_to_ptr.vmem [resolvable:$true] %s196
          %202 = dma.hbm_to_vmem [thread:$0]  %s195, 512, %s197, %s183, 256, 256, 16
        $region28: #{pct_forward.3} parent=23 // pred_fallthru
          _
        // Predicated region
        $region29: #{pct_forward.3} parent=23 // pred_check
          %p203 = pneg %p78
        $region30: #{pct_forward.3} parent=23 // pred_check_branch
          %205 = sbr.rel (%p203) target = $region32
        $region31: #{pct_forward.3} parent=23 // pred_region
          %s206 = smul.u32 2, %s24
          %p207 = scmp.lt.s32.totalorder %s23, 1
          %s208 = scalar_select %p207, %s23, 1
          %p209 = scmp.lt.s32.totalorder %s206, 1
          %s210 = scalar_select %p209, %s206, 1
          %s211 = smul.addr %s208, 4
          %s212 = sadd.s32 %s210, %s211
          %s213 = smul.addr %s212, 8
          %s214 = scalar_lea.vmem %s1, %s213
          %s215 = smul.u32 2, %s24
        $region32: #{pct_forward.3} parent=23 // pred_fallthru
          _
      $region24: #{pct_forward.3} parent=5 // pred_fallthru
        _
      %p216 = scmp.le.s32.totalorder 1, %s16
      %p217 = scmp.lt.s32.totalorder %s16, 3
      %p218 = pnand %p216, %p217
      %p219 = pneg %p218
      // Predicated region
      $region33: #{pct_forward.3} parent=5 // pred_check
        _
      $region34: #{pct_forward.3} parent=5 // pred_check_branch
        %221 = sbr.rel (%p218) target = $region36
      $region35: #{pct_forward.3} parent=5 // pred_region
        %s222 = ssub.s32 %s16, 1
        %s223 = sand.u32 %s43, 1
        %s224 = scalar_lea.sflag [#allocation3], %s223
        %s225 = sand.u32 %s43, 1
        %s226 = smul.addr %s225, 32
        %s227 = scalar_lea.vmem [#allocation2], %s226
        // Predicated region
        $region37: #{pct_forward.3} parent=35 // pred_check
          %p228 = pneg %p56
        $region38: #{pct_forward.3} parent=35 // pred_check_branch
          %230 = sbr.rel (%p228) target = $region40
        $region39: #{pct_forward.3} parent=35 // pred_region
          %232 = dma.done %s224, 512
        $region40: #{pct_forward.3} parent=35 // pred_fallthru
          _
        %s233 = sand.u32 %s43, 1
        %s234 = scalar_lea.sflag [#allocation3], %s233
        %s235 = sand.u32 %s43, 1
        %s236 = smul.addr %s235, 32
        %s237 = scalar_lea.vmem [#allocation2], %s236
        %p238 = pneg %p56
        %p239 = pneg %p53
        %s240 = smul.u32 2, %s26
        %p241 = scmp.lt.s32.totalorder %s25, 1
        %s242 = scalar_select %p241, %s25, 1
        %p243 = scmp.lt.s32.totalorder %s240, 1
        %s244 = scalar_select %p243, %s240, 1
        %s245 = smul.addr %s242, 4
        %s246 = sadd.s32 %s244, %s245
        %s247 = smul.addr %s246, 8
        %s248 = scalar_lea.vmem %s1, %s247
        %p249 = pneg %p84
        %p250 = pneg %p81
        %p251 = pneg %p105
        %p252 = pneg %p102
        %p253 = pneg %p126
        %p254 = pneg %p123
        %p255 = pneg %p154
        %p256 = pneg %p151
        %s257 = sand.u32 %s141, 1
        %s258 = scalar_lea.sflag [#allocation4], %s257
        %s259 = sand.u32 %s141, 1
        %s260 = smul.addr %s259, 32
        %s261 = scalar_lea.vmem [#allocation5], %s260
        %s262 = smul.u32 2, %s26
        %s263 = smul.u32 2, %s26
        %p264 = scmp.lt.s32.totalorder %s25, 1
        %s265 = scalar_select %p264, %s25, 1
        %p266 = scmp.lt.s32.totalorder %s263, 1
        %s267 = scalar_select %p266, %s263, 1
        %s268 = smul.addr %s265, 4
        %s269 = sadd.s32 %s267, %s268
        %s270 = smul.addr %s269, 8
        %s271 = scalar_lea.vmem %s1, %s270
        %s272 = smul.u32 2, %s26
        %s273 = smul.u32 2, %s26
        %v274 = vld [vmem:[%s227] sm:$0xff]
        %v275 = vld [vmem:[%s227 + $0x8] sm:$0xff]
        %v276 = vld [vmem:[%s227 + $0x10] sm:$0xff]
        %v277 = vld [vmem:[%s227 + $0x18] sm:$0xff]
        %v278 = vld [vmem:[%s2] sm:$0xff]
        %v279 = vld [vmem:[%s2 + $0x8] sm:$0xff]
        %281 = vset.pattern.permute.xlu0 0
        %282 = vperm.xlu0 %281, %v278
        %v283 = vpop.permute.xlu0 %282
        %286 = vset.pattern.permute.xlu0 0
        %287 = vperm.xlu0 %286, %v279
        %v288 = vpop.permute.xlu0 %287
        %v290 = vmul.f32 %v274, %v283
        %v291 = vmul.f32 %v275, %v283
        %v292 = vmul.f32 %v276, %v288
        %v293 = vmul.f32 %v277, %v288
        %v294 = vld [vmem:[%s3] sm:$0xff]
        %v295 = vld [vmem:[%s3 + $0x8] sm:$0xff]
        %297 = vset.pattern.permute.xlu0 0
        %298 = vperm.xlu0 %297, %v294
        %v299 = vpop.permute.xlu0 %298
        %302 = vset.pattern.permute.xlu0 0
        %303 = vperm.xlu0 %302, %v295
        %v304 = vpop.permute.xlu0 %303
        %v306 = vadd.f32 %v290, %v299
        %v307 = vadd.f32 %v291, %v299
        %v308 = vadd.f32 %v292, %v304
        %v309 = vadd.f32 %v293, %v304
        %v310 = vmax.f32 %v306, 0.0
        %v311 = vmax.f32 %v307, 0.0
        %v312 = vmax.f32 %v308, 0.0
        %v313 = vmax.f32 %v309, 0.0
        %v314 = vld [vmem:[%s271] sm:$0xff]
        %v315 = vld [vmem:[%s271 + $0x8] sm:$0xff]
        %v316 = vld [vmem:[%s271 + $0x10] sm:$0xff]
        %v317 = vld [vmem:[%s271 + $0x18] sm:$0xff]
        %v318 = vadd.f32 %v314, %v310
        %v319 = vadd.f32 %v315, %v311
        %v320 = vadd.f32 %v316, %v312
        %v321 = vadd.f32 %v317, %v313
        %322 = vst [vmem:[%s261] sm:$0xff] %v318
        %323 = vst [vmem:[%s261 + $0x8] sm:$0xff] %v319
        %324 = vst [vmem:[%s261 + $0x10] sm:$0xff] %v320
        %325 = vst [vmem:[%s261 + $0x18] sm:$0xff] %v321
        %s326 = sand.u32 %s141, 1
        %s327 = scalar_lea.sflag [#allocation4], %s326
        %s328 = sand.u32 %s141, 1
        %s329 = smul.addr %s328, 32
        %s330 = scalar_lea.vmem [#allocation5], %s329
        // Predicated region
        $region41: #{pct_forward.3} parent=35 // pred_check
          %p331 = pneg %p151
        $region42: #{pct_forward.3} parent=35 // pred_check_branch
          %333 = sbr.rel (%p331) target = $region44
        $region43: #{pct_forward.3} parent=35 // pred_region
          %s334 = smul.u32 2, %s26
          %336 = vsyncadd %s327, 0
          %s337 = smul.addr %s25, 4
          %s338 = sadd.s32 %s334, %s337
          %s339 = smul.addr %s338, 8
          %s340 = scalar_lea.hbm %s4, %s339
          %s341 = sshll.u32 %s330, 4
          %s342 = int_to_ptr.vmem [resolvable:$true] %s341
          %s343 = sshll.u32 %s340, 4
          %s344 = int_to_ptr.hbm [resolvable:$true] %s343
          %349 = dma.vmem_to_hbm [thread:$0]  %s342, 512, %s344, %s327, 256, 256, 16
        $region44: #{pct_forward.3} parent=35 // pred_fallthru
          _
      $region36: #{pct_forward.3} parent=5 // pred_fallthru
        _
      %p350 = scmp.le.s32.totalorder 2, %s16
      // Predicated region
      $region45: #{pct_forward.3} parent=5 // pred_check
        %p351 = pneg %p350
      $region46: #{pct_forward.3} parent=5 // pred_check_branch
        %353 = sbr.rel (%p351) target = $region48
      $region47: #{pct_forward.3} parent=5 // pred_region
        %s354 = ssub.s32 %s16, 2
        // Predicated region
        $region49: #{pct_forward.3} parent=47 // pred_check
          %p355 = pneg %p157
        $region50: #{pct_forward.3} parent=47 // pred_check_branch
          %357 = sbr.rel (%p355) target = $region52
        $region51: #{pct_forward.3} parent=47 // pred_region
          %s358 = sand.u32 %s142, 1
          %s359 = scalar_lea.sflag [#allocation4], %s358
          %s360 = sand.u32 %s142, 1
          %s361 = smul.addr %s360, 32
          %s362 = scalar_lea.vmem [#allocation5], %s361
          %364 = dma.done %s359, 512
        $region52: #{pct_forward.3} parent=47 // pred_fallthru
          _
      $region48: #{pct_forward.3} parent=5 // pred_fallthru
        _
    $region6: #{pct_forward.3} parent=1 // loop_footer
      %s20 = sadd.s32 1, %s16
    $region7: #{pct_forward.3} parent=1 // loop_footer_branch
      %15 = sbr.rel target = $region3
    $region8: #{pct_forward.3} parent=1 // loop_exit
      _
    %365 = vsyncpa [#allocation3], 1
    %s366 = scalar_lea.sflag [#allocation3], 1
    %367 = vsyncpa %s366, 1
    %368 = vsyncpa [#allocation4], 1
    %s369 = scalar_lea.sflag [#allocation4], 1
    %370 = vsyncpa %s369, 1

// kernel: pct_forward.2
$region0: #{pct_forward.2}
  #allocation0 [shape = 'u32[]', space=smem, size = 0x4, offset = 0x4, fixed_abs, tag = 'smem constant byte address 0x4 - core index']
  #allocation1 [shape = 'u32[72,128]{1,0:T(1,128)}', space=vmem, size = 0x9000, scoped, tag = 'internal scratch']
  #allocation2 [shape = 'f32[8,256]{1,0:T(8,128)}', space=vmem, size = 0x2000, scoped, tag = 'scratch operand']
  #allocation3 [shape = 'f32[16,256]{1,0:T(8,128)}', space=vmem, size = 0x4000, scoped, tag = 'scratch operand']
  #allocation4 [shape = 'f32[16,256]{1,0:T(8,128)}', space=vmem, size = 0x4000, scoped, tag = 'scratch operand']
  #allocation5 [shape = 'f32[1,256]{1,0:T(1,128)}', space=vmem, size = 0x400, scoped, tag = 'scratch operand']
  %s0 = inlined_call_operand.vmem [shape: f32[2,16,256], index: 0, kind: input, shape index: {}]
  %s1 = inlined_call_operand.vmem [shape: f32[2,16,256], index: 1, kind: input, shape index: {}]
  %s2 = inlined_call_operand.vmem [shape: f32[8,16], index: 2, kind: input, shape index: {}]
  %s3 = inlined_call_operand.vmem [shape: f32[8,16], index: 3, kind: input, shape index: {}]
  %s4 = inlined_call_operand.vmem [shape: f32[16,16], index: 4, kind: input, shape index: {}]
  %s5 = inlined_call_operand.vmem [shape: f32[16,1], index: 5, kind: input, shape index: {}]
  %s6 = inlined_call_operand.vmem [shape: f32[16,16], index: 6, kind: input, shape index: {}]
  %s7 = inlined_call_operand.vmem [shape: f32[16,1], index: 7, kind: input, shape index: {}]
  %s8 = inlined_call_operand.hbm [shape: f32[2,16,256], index: 8, kind: output, shape index: {0}]
  %s9 = inlined_call_operand.vmem [shape: f32[2,16,1], index: 9, kind: output, shape index: {1}]
  %s10 = inlined_call_operand.vmem [shape: f32[2,16,1], index: 10, kind: output, shape index: {2}]
  %11 = xla_tuple %s8, %s9, %s10
  %s12 = sld [smem:[#allocation0]]
  $region89: #{pct_forward.2} parent=0
    _
  %s14 = ssub.s32 1, %s12
  %s15 = scalar_select 0, %s14, %s12
  $region1: #{pct_forward.2} parent=0
    #allocation6 [shape = 'u8[32768]{0}', space=vmem, size = 0x8000, scoped, tag = 'output window, operand 0']
    #allocation7 [shape = 's32[2]{0}', space=sflag, size = 0x8, scoped, tag = 'scoped memory for pct_forward.2']
    %16 = vsyncpa [#allocation7], 0
    %s17 = scalar_lea.sflag [#allocation7], 1
    %18 = vsyncpa %s17, 0
    loop: start=0, step=1, limit=6
    $region2: #{pct_forward.2} parent=1 // loop_pre_header
      _
    $region3: #{pct_forward.2} parent=1 // loop_header
      %s20 = sphi 0, %s24
      %p21 = scmp.ge.s32.totalorder %s20, 6
      %s27 = sphi 0, %s39
      %s28 = sphi 0, %s35
      %s29 = sphi 0, %s27
      %s30 = sphi 0, %s28
      %s31 = sphi 0, %s29
      %s32 = sphi 0, %s30
      %s42 = sphi 0, %s44
      %s45 = sphi 0, %s42
      %s46 = sphi 0, %s45
      %s62 = sphi 0, %s46
      %s68 = sphi 0, %s70
      %s71 = sphi 0, %s68
      %s72 = sphi 0, %s71
      %s88 = sphi 0, %s72
      %s92 = sphi 0, %s92
      %s94 = sphi 0, %s92
      %s95 = sphi 0, %s94
      %s109 = sphi 0, %s95
      %s113 = sphi 0, %s113
      %s115 = sphi 0, %s113
      %s116 = sphi 0, %s115
      %s130 = sphi 0, %s116
      %s134 = sphi 0, %s134
      %s136 = sphi 0, %s134
      %s137 = sphi 0, %s136
      %s151 = sphi 0, %s137
      %s155 = sphi 0, %s155
      %s157 = sphi 0, %s155
      %s158 = sphi 0, %s157
      %s172 = sphi 0, %s158
      %s176 = sphi 0, %s176
      %s178 = sphi 0, %s176
      %s179 = sphi 0, %s178
      %s193 = sphi 0, %s179
      %s197 = sphi 0, %s197
      %s199 = sphi 0, %s197
      %s200 = sphi 0, %s199
      %s214 = sphi 0, %s200
      %s220 = sphi 0, %s222
      %s223 = sphi 0, %s220
      %s224 = sphi 0, %s223
      %s240 = sphi 0, %s224
      %s246 = sphi 0, %s248
      %s249 = sphi 0, %s246
      %s250 = sphi 0, %s249
      %s266 = sphi 0, %s250
      %s272 = sphi 0, %s274
      %s275 = sphi 0, %s272
      %s276 = sphi 0, %s275
      %s292 = sphi 0, %s276
    $region4: #{pct_forward.2} parent=1 // loop_header_branch
      %23 = sbr.rel (%p21) target = $region8
    $region5: #{pct_forward.2} parent=1 // loop_body
      %s25 = ssub.s32 %s20, 1
      %s26 = ssub.s32 %s20, 2
      %s33 = sadd.s32 1, %s28
      %p34 = scmp.ge.s32.totalorder %s33, 2
      %s35 = scalar_select %p34, 0, %s33
      %s36 = sadd.s32 1, %s27
      %s37 = scalar_select %p34, %s36, %s27
      %p38 = scmp.ge.s32.totalorder %s37, 2
      %s39 = scalar_select %p38, 0, %s37
      %s40 = ssub.s32 %s27, %s39
      %p41 = scmp.eq.s32.totalorder %s40, 0
      %s43 = sadd.s32 %s42, 1
      %s44 = scalar_select %p41, %s42, %s43
      %p47 = pneg %p41
      %p48 = scmp.eq.s32.totalorder %s20, 3
      %p49 = por %p47, %p48
      %p50 = scmp.ne.s32.totalorder %s42, %s45
      %p51 = scmp.eq.s32.totalorder %s20, 0
      %p52 = por %p50, %p51
      %p53 = scmp.ne.s32.totalorder %s42, %s45
      %p54 = scmp.eq.s32.totalorder %s25, 3
      %p55 = por %p53, %p54
      %p56 = scmp.ne.s32.totalorder %s45, %s46
      %p57 = scmp.eq.s32.totalorder %s25, 0
      %p58 = por %p56, %p57
      %p59 = scmp.ne.s32.totalorder %s45, %s46
      %p60 = scmp.eq.s32.totalorder %s26, 3
      %p61 = por %p59, %p60
      %p63 = scmp.ne.s32.totalorder %s46, %s62
      %p64 = scmp.eq.s32.totalorder %s26, 0
      %p65 = por %p63, %p64
      %s66 = ssub.s32 %s27, %s39
      %p67 = scmp.eq.s32.totalorder %s66, 0
      %s69 = sadd.s32 %s68, 1
      %s70 = scalar_select %p67, %s68, %s69
      %p73 = pneg %p67
      %p74 = scmp.eq.s32.totalorder %s20, 3
      %p75 = por %p73, %p74
      %p76 = scmp.ne.s32.totalorder %s68, %s71
      %p77 = scmp.eq.s32.totalorder %s20, 0
      %p78 = por %p76, %p77
      %p79 = scmp.ne.s32.totalorder %s68, %s71
      %p80 = scmp.eq.s32.totalorder %s25, 3
      %p81 = por %p79, %p80
      %p82 = scmp.ne.s32.totalorder %s71, %s72
      %p83 = scmp.eq.s32.totalorder %s25, 0
      %p84 = por %p82, %p83
      %p85 = scmp.ne.s32.totalorder %s71, %s72
      %p86 = scmp.eq.s32.totalorder %s26, 3
      %p87 = por %p85, %p86
      %p89 = scmp.ne.s32.totalorder %s72, %s88
      %p90 = scmp.eq.s32.totalorder %s26, 0
      %p91 = por %p89, %p90
      %s93 = sadd.s32 %s92, 1
      %p96 = scmp.eq.s32.totalorder %s20, 3
      %p97 = scmp.ne.s32.totalorder %s92, %s94
      %p98 = scmp.eq.s32.totalorder %s20, 0
      %p99 = por %p97, %p98
      %p100 = scmp.ne.s32.totalorder %s92, %s94
      %p101 = scmp.eq.s32.totalorder %s25, 3
      %p102 = por %p100, %p101
      %p103 = scmp.ne.s32.totalorder %s94, %s95
      %p104 = scmp.eq.s32.totalorder %s25, 0
      %p105 = por %p103, %p104
      %p106 = scmp.ne.s32.totalorder %s94, %s95
      %p107 = scmp.eq.s32.totalorder %s26, 3
      %p108 = por %p106, %p107
      %p110 = scmp.ne.s32.totalorder %s95, %s109
      %p111 = scmp.eq.s32.totalorder %s26, 0
      %p112 = por %p110, %p111
      %s114 = sadd.s32 %s113, 1
      %p117 = scmp.eq.s32.totalorder %s20, 3
      %p118 = scmp.ne.s32.totalorder %s113, %s115
      %p119 = scmp.eq.s32.totalorder %s20, 0
      %p120 = por %p118, %p119
      %p121 = scmp.ne.s32.totalorder %s113, %s115
      %p122 = scmp.eq.s32.totalorder %s25, 3
      %p123 = por %p121, %p122
      %p124 = scmp.ne.s32.totalorder %s115, %s116
      %p125 = scmp.eq.s32.totalorder %s25, 0
      %p126 = por %p124, %p125
      %p127 = scmp.ne.s32.totalorder %s115, %s116
      %p128 = scmp.eq.s32.totalorder %s26, 3
      %p129 = por %p127, %p128
      %p131 = scmp.ne.s32.totalorder %s116, %s130
      %p132 = scmp.eq.s32.totalorder %s26, 0
      %p133 = por %p131, %p132
      %s135 = sadd.s32 %s134, 1
      %p138 = scmp.eq.s32.totalorder %s20, 3
      %p139 = scmp.ne.s32.totalorder %s134, %s136
      %p140 = scmp.eq.s32.totalorder %s20, 0
      %p141 = por %p139, %p140
      %p142 = scmp.ne.s32.totalorder %s134, %s136
      %p143 = scmp.eq.s32.totalorder %s25, 3
      %p144 = por %p142, %p143
      %p145 = scmp.ne.s32.totalorder %s136, %s137
      %p146 = scmp.eq.s32.totalorder %s25, 0
      %p147 = por %p145, %p146
      %p148 = scmp.ne.s32.totalorder %s136, %s137
      %p149 = scmp.eq.s32.totalorder %s26, 3
      %p150 = por %p148, %p149
      %p152 = scmp.ne.s32.totalorder %s137, %s151
      %p153 = scmp.eq.s32.totalorder %s26, 0
      %p154 = por %p152, %p153
      %s156 = sadd.s32 %s155, 1
      %p159 = scmp.eq.s32.totalorder %s20, 3
      %p160 = scmp.ne.s32.totalorder %s155, %s157
      %p161 = scmp.eq.s32.totalorder %s20, 0
      %p162 = por %p160, %p161
      %p163 = scmp.ne.s32.totalorder %s155, %s157
      %p164 = scmp.eq.s32.totalorder %s25, 3
      %p165 = por %p163, %p164
      %p166 = scmp.ne.s32.totalorder %s157, %s158
      %p167 = scmp.eq.s32.totalorder %s25, 0
      %p168 = por %p166, %p167
      %p169 = scmp.ne.s32.totalorder %s157, %s158
      %p170 = scmp.eq.s32.totalorder %s26, 3
      %p171 = por %p169, %p170
      %p173 = scmp.ne.s32.totalorder %s158, %s172
      %p174 = scmp.eq.s32.totalorder %s26, 0
      %p175 = por %p173, %p174
      %s177 = sadd.s32 %s176, 1
      %p180 = scmp.eq.s32.totalorder %s20, 3
      %p181 = scmp.ne.s32.totalorder %s176, %s178
      %p182 = scmp.eq.s32.totalorder %s20, 0
      %p183 = por %p181, %p182
      %p184 = scmp.ne.s32.totalorder %s176, %s178
      %p185 = scmp.eq.s32.totalorder %s25, 3
      %p186 = por %p184, %p185
      %p187 = scmp.ne.s32.totalorder %s178, %s179
      %p188 = scmp.eq.s32.totalorder %s25, 0
      %p189 = por %p187, %p188
      %p190 = scmp.ne.s32.totalorder %s178, %s179
      %p191 = scmp.eq.s32.totalorder %s26, 3
      %p192 = por %p190, %p191
      %p194 = scmp.ne.s32.totalorder %s179, %s193
      %p195 = scmp.eq.s32.totalorder %s26, 0
      %p196 = por %p194, %p195
      %s198 = sadd.s32 %s197, 1
      %p201 = scmp.eq.s32.totalorder %s20, 3
      %p202 = scmp.ne.s32.totalorder %s197, %s199
      %p203 = scmp.eq.s32.totalorder %s20, 0
      %p204 = por %p202, %p203
      %p205 = scmp.ne.s32.totalorder %s197, %s199
      %p206 = scmp.eq.s32.totalorder %s25, 3
      %p207 = por %p205, %p206
      %p208 = scmp.ne.s32.totalorder %s199, %s200
      %p209 = scmp.eq.s32.totalorder %s25, 0
      %p210 = por %p208, %p209
      %p211 = scmp.ne.s32.totalorder %s199, %s200
      %p212 = scmp.eq.s32.totalorder %s26, 3
      %p213 = por %p211, %p212
      %p215 = scmp.ne.s32.totalorder %s200, %s214
      %p216 = scmp.eq.s32.totalorder %s26, 0
      %p217 = por %p215, %p216
      %s218 = ssub.s32 %s27, %s39
      %p219 = scmp.eq.s32.totalorder %s218, 0
      %s221 = sadd.s32 %s220, 1
      %s222 = scalar_select %p219, %s220, %s221
      %p225 = pneg %p219
      %p226 = scmp.eq.s32.totalorder %s20, 3
      %p227 = por %p225, %p226
      %p228 = scmp.ne.s32.totalorder %s220, %s223
      %p229 = scmp.eq.s32.totalorder %s20, 0
      %p230 = por %p228, %p229
      %p231 = scmp.ne.s32.totalorder %s220, %s223
      %p232 = scmp.eq.s32.totalorder %s25, 3
      %p233 = por %p231, %p232
      %p234 = scmp.ne.s32.totalorder %s223, %s224
      %p235 = scmp.eq.s32.totalorder %s25, 0
      %p236 = por %p234, %p235
      %p237 = scmp.ne.s32.totalorder %s223, %s224
      %p238 = scmp.eq.s32.totalorder %s26, 3
      %p239 = por %p237, %p238
      %p241 = scmp.ne.s32.totalorder %s224, %s240
      %p242 = scmp.eq.s32.totalorder %s26, 0
      %p243 = por %p241, %p242
      %s244 = ssub.s32 %s27, %s39
      %p245 = scmp.eq.s32.totalorder %s244, 0
      %s247 = sadd.s32 %s246, 1
      %s248 = scalar_select %p245, %s246, %s247
      %p251 = pneg %p245
      %p252 = scmp.eq.s32.totalorder %s20, 3
      %p253 = por %p251, %p252
      %p254 = scmp.ne.s32.totalorder %s246, %s249
      %p255 = scmp.eq.s32.totalorder %s20, 0
      %p256 = por %p254, %p255
      %p257 = scmp.ne.s32.totalorder %s246, %s249
      %p258 = scmp.eq.s32.totalorder %s25, 3
      %p259 = por %p257, %p258
      %p260 = scmp.ne.s32.totalorder %s249, %s250
      %p261 = scmp.eq.s32.totalorder %s25, 0
      %p262 = por %p260, %p261
      %p263 = scmp.ne.s32.totalorder %s249, %s250
      %p264 = scmp.eq.s32.totalorder %s26, 3
      %p265 = por %p263, %p264
      %p267 = scmp.ne.s32.totalorder %s250, %s266
      %p268 = scmp.eq.s32.totalorder %s26, 0
      %p269 = por %p267, %p268
      %s270 = ssub.s32 %s27, %s39
      %p271 = scmp.eq.s32.totalorder %s270, 0
      %s273 = sadd.s32 %s272, 1
      %s274 = scalar_select %p271, %s272, %s273
      %p277 = pneg %p271
      %p278 = scmp.eq.s32.totalorder %s20, 3
      %p279 = por %p277, %p278
      %p280 = scmp.ne.s32.totalorder %s272, %s275
      %p281 = scmp.eq.s32.totalorder %s20, 0
      %p282 = por %p280, %p281
      %p283 = scmp.ne.s32.totalorder %s272, %s275
      %p284 = scmp.eq.s32.totalorder %s25, 3
      %p285 = por %p283, %p284
      %p286 = scmp.ne.s32.totalorder %s275, %s276
      %p287 = scmp.eq.s32.totalorder %s25, 0
      %p288 = por %p286, %p287
      %p289 = scmp.ne.s32.totalorder %s275, %s276
      %p290 = scmp.eq.s32.totalorder %s26, 3
      %p291 = por %p289, %p290
      %p293 = scmp.ne.s32.totalorder %s276, %s292
      %p294 = scmp.eq.s32.totalorder %s26, 0
      %p295 = por %p293, %p294
      %p296 = scmp.le.s32.totalorder 1, %s20
      %p297 = scmp.lt.s32.totalorder %s20, 5
      %p298 = pnand %p296, %p297
      %p299 = pneg %p298
      // Predicated region
      $region9: #{pct_forward.2} parent=5 // pred_check
        _
      $region10: #{pct_forward.2} parent=5 // pred_check_branch
        %301 = sbr.rel (%p298) target = $region12
      $region11: #{pct_forward.2} parent=5 // pred_region
        %s302 = ssub.s32 %s20, 1
        // Predicated region
        $region13: #{pct_forward.2} parent=11 // pred_check
          %p303 = pneg %p105
        $region14: #{pct_forward.2} parent=11 // pred_check_branch
          %305 = sbr.rel (%p303) target = $region16
        $region15: #{pct_forward.2} parent=11 // pred_region
          _
        $region16: #{pct_forward.2} parent=11 // pred_fallthru
          _
        // Predicated region
        $region17: #{pct_forward.2} parent=11 // pred_check
          %p306 = pneg %p126
        $region18: #{pct_forward.2} parent=11 // pred_check_branch
          %308 = sbr.rel (%p306) target = $region20
        $region19: #{pct_forward.2} parent=11 // pred_region
          _
        $region20: #{pct_forward.2} parent=11 // pred_fallthru
          _
        // Predicated region
        $region21: #{pct_forward.2} parent=11 // pred_check
          %p309 = pneg %p147
        $region22: #{pct_forward.2} parent=11 // pred_check_branch
          %311 = sbr.rel (%p309) target = $region24
        $region23: #{pct_forward.2} parent=11 // pred_region
          _
        $region24: #{pct_forward.2} parent=11 // pred_fallthru
          _
        // Predicated region
        $region25: #{pct_forward.2} parent=11 // pred_check
          %p312 = pneg %p168
        $region26: #{pct_forward.2} parent=11 // pred_check_branch
          %314 = sbr.rel (%p312) target = $region28
        $region27: #{pct_forward.2} parent=11 // pred_region
          _
        $region28: #{pct_forward.2} parent=11 // pred_fallthru
          _
        // Predicated region
        $region29: #{pct_forward.2} parent=11 // pred_check
          %p315 = pneg %p189
        $region30: #{pct_forward.2} parent=11 // pred_check_branch
          %317 = sbr.rel (%p315) target = $region32
        $region31: #{pct_forward.2} parent=11 // pred_region
          _
        $region32: #{pct_forward.2} parent=11 // pred_fallthru
          _
        // Predicated region
        $region33: #{pct_forward.2} parent=11 // pred_check
          %p318 = pneg %p210
        $region34: #{pct_forward.2} parent=11 // pred_check_branch
          %320 = sbr.rel (%p318) target = $region36
        $region35: #{pct_forward.2} parent=11 // pred_region
          _
        $region36: #{pct_forward.2} parent=11 // pred_fallthru
          _
      $region12: #{pct_forward.2} parent=5 // pred_fallthru
        _
      %p321 = scmp.lt.s32.totalorder %s20, 4
      // Predicated region
      $region37: #{pct_forward.2} parent=5 // pred_check
        %p322 = pneg %p321
      $region38: #{pct_forward.2} parent=5 // pred_check_branch
        %324 = sbr.rel (%p322) target = $region40
      $region39: #{pct_forward.2} parent=5 // pred_region
        // Predicated region
        $region41: #{pct_forward.2} parent=39 // pred_check
          %p325 = pneg %p52
        $region42: #{pct_forward.2} parent=39 // pred_check_branch
          %327 = sbr.rel (%p325) target = $region44
        $region43: #{pct_forward.2} parent=39 // pred_region
          %p328 = scmp.lt.s32.totalorder %s27, 1
          %s329 = scalar_select %p328, %s27, 1
          %s330 = smul.addr %s329, 4
          %s331 = smul.addr %s330, 8
          %s332 = scalar_lea.vmem %s0, %s331
        $region44: #{pct_forward.2} parent=39 // pred_fallthru
          _
        // Predicated region
        $region45: #{pct_forward.2} parent=39 // pred_check
          %p333 = pneg %p78
        $region46: #{pct_forward.2} parent=39 // pred_check_branch
          %335 = sbr.rel (%p333) target = $region48
        $region47: #{pct_forward.2} parent=39 // pred_region
          %p336 = scmp.lt.s32.totalorder %s27, 1
          %s337 = scalar_select %p336, %s27, 1
          %s338 = smul.addr %s337, 4
          %s339 = smul.addr %s338, 8
          %s340 = scalar_lea.vmem %s1, %s339
        $region48: #{pct_forward.2} parent=39 // pred_fallthru
          _
      $region40: #{pct_forward.2} parent=5 // pred_fallthru
        _
      %p341 = scmp.le.s32.totalorder 1, %s20
      %p342 = scmp.lt.s32.totalorder %s20, 5
      %p343 = pnand %p341, %p342
      %p344 = pneg %p343
      // Predicated region
      $region49: #{pct_forward.2} parent=5 // pred_check
        _
      $region50: #{pct_forward.2} parent=5 // pred_check_branch
        %346 = sbr.rel (%p343) target = $region52
      $region51: #{pct_forward.2} parent=5 // pred_region
        %s347 = ssub.s32 %s20, 1
        %p348 = scmp.lt.s32.totalorder %s29, 1
        %s349 = scalar_select %p348, %s29, 1
        %s350 = smul.addr %s349, 4
        %s351 = smul.addr %s350, 8
        %s352 = scalar_lea.vmem %s0, %s351
        %p353 = pneg %p58
        %p354 = pneg %p55
        %p355 = scmp.lt.s32.totalorder %s29, 1
        %s356 = scalar_select %p355, %s29, 1
        %s357 = smul.addr %s356, 4
        %s358 = smul.addr %s357, 8
        %s359 = scalar_lea.vmem %s1, %s358
        %p360 = pneg %p84
        %p361 = pneg %p81
        %p362 = pneg %p105
        %p363 = pneg %p102
        %p364 = pneg %p126
        %p365 = pneg %p123
        %p366 = pneg %p147
        %p367 = pneg %p144
        %p368 = pneg %p168
        %p369 = pneg %p165
        %p370 = pneg %p189
        %p371 = pneg %p186
        %p372 = pneg %p210
        %p373 = pneg %p207
        %p374 = pneg %p236
        %p375 = pneg %p233
        %s376 = sand.u32 %s223, 1
        %s377 = scalar_lea.sflag [#allocation7], %s376
        %s378 = sand.u32 %s223, 1
        %s379 = smul.addr %s378, 32
        %s380 = scalar_lea.vmem [#allocation6], %s379
        %p381 = pneg %p262
        %p382 = pneg %p259
        %p383 = scmp.lt.s32.totalorder %s29, 1
        %s384 = scalar_select %p383, %s29, 1
        %s385 = smul.addr %s384, 2
        %s386 = smul.addr %s385, 8
        %s387 = scalar_lea.vmem %s9, %s386
        %p388 = pneg %p288
        %p389 = pneg %p285
        %p390 = scmp.lt.s32.totalorder %s29, 1
        %s391 = scalar_select %p390, %s29, 1
        %s392 = smul.addr %s391, 2
        %s393 = smul.addr %s392, 8
        %s394 = scalar_lea.vmem %s10, %s393
        %p395 = scmp.lt.s32.totalorder %s29, 1
        %s396 = scalar_select %p395, %s29, 1
        %s397 = smul.addr %s396, 4
        %s398 = smul.addr %s397, 8
        %s399 = scalar_lea.vmem %s0, %s398
        %p400 = scmp.lt.s32.totalorder %s29, 1
        %s401 = scalar_select %p400, %s29, 1
        %s402 = smul.addr %s401, 4
        %s403 = smul.addr %s402, 8
        %s404 = scalar_lea.vmem %s1, %s403
        %p405 = scmp.lt.s32.totalorder %s29, 1
        %s406 = scalar_select %p405, %s29, 1
        %s407 = smul.addr %s406, 2
        %s408 = smul.addr %s407, 8
        %s409 = scalar_lea.vmem %s9, %s408
        %p410 = scmp.lt.s32.totalorder %s29, 1
        %s411 = scalar_select %p410, %s29, 1
        %s412 = smul.addr %s411, 2
        %s413 = smul.addr %s412, 8
        %s414 = scalar_lea.vmem %s10, %s413
        %p415 = scmp.eq.s32.totalorder %s30, 0
        // Predicated region
        $region53: #{pct_forward.2} parent=51 // pred_check
          %p416 = pneg %p415
        $region54: #{pct_forward.2} parent=51 // pred_check_branch
          %418 = sbr.rel (%p416) target = $region56
        $region55: #{pct_forward.2} parent=51 // pred_region
          %v419 = vld [vmem:[%s399] sm:$0xff]
          %v420 = vld [vmem:[%s399 + $0x8] sm:$0xff]
          %v421 = vld [vmem:[%s399 + $0x10] sm:$0xff]
          %v422 = vld [vmem:[%s399 + $0x18] sm:$0xff]
          %v423 = vld [vmem:[%s404] sm:$0xff]
          %v424 = vld [vmem:[%s404 + $0x8] sm:$0xff]
          %v425 = vld [vmem:[%s404 + $0x10] sm:$0xff]
          %v426 = vld [vmem:[%s404 + $0x18] sm:$0xff]
          %v427 = vld [vmem:[%s2] sm:$0xff]
          %v428 = vld [vmem:[%s3] sm:$0xff]
          %vm429 = vcmask 130048
          %v431 = vsel %vm429, %v428, 0
          %433 = vmatpush.msra.mxu0 0.0
          %434 = vmatpush.msra.mxu0 0.0
          %435 = vmatpush.msra.mxu0 0.0
          %436 = vmatpush.msra.mxu0 0.0
          %437 = vmatpush.msra.mxu0 0.0
          %438 = vmatpush.msra.mxu0 0.0
          %439 = vmatpush.msra.mxu0 0.0
          %440 = vmatpush.msra.mxu0 0.0
          %441 = vmatpush.msra.mxu0 0.0
          %442 = vmatpush.msra.mxu0 0.0
          %443 = vmatpush.msra.mxu0 0.0
          %444 = vmatpush.msra.mxu0 0.0
          %445 = vmatpush.msra.mxu0 0.0
          %446 = vmatpush.msra.mxu0 0.0
          %447 = vmatpush.msra.mxu0 %v425
          %448 = vmatpush.msra.mxu0 %v423
          %449 = vmatmul.f32.gmra.mxu0 %v431
          %v450 = vpop.f32.mrf.mxu0
          %v451 = vadd.f32 0.0, %v450
          %452 = vdwg.mxu0
          %453 = vmatpush.msra.mxu0 0.0
          %454 = vmatpush.msra.mxu0 0.0
          %455 = vmatpush.msra.mxu0 0.0
          %456 = vmatpush.msra.mxu0 0.0
          %457 = vmatpush.msra.mxu0 0.0
          %458 = vmatpush.msra.mxu0 0.0
          %459 = vmatpush.msra.mxu0 0.0
          %460 = vmatpush.msra.mxu0 0.0
          %461 = vmatpush.msra.mxu0 0.0
          %462 = vmatpush.msra.mxu0 0.0
          %463 = vmatpush.msra.mxu0 0.0
          %464 = vmatpush.msra.mxu0 0.0
          %465 = vmatpush.msra.mxu0 0.0
          %466 = vmatpush.msra.mxu0 0.0
          %467 = vmatpush.msra.mxu0 %v426
          %468 = vmatpush.msra.mxu0 %v424
          %469 = vmatmul.f32.gmra.mxu0 %v431
          %v470 = vpop.f32.mrf.mxu0
          %v471 = vadd.f32 0.0, %v470
          %472 = vdwg.mxu0
          %v474 = vsel %vm429, %v427, 0
          %476 = vmatpush.msra.mxu0 0.0
          %477 = vmatpush.msra.mxu0 0.0
          %478 = vmatpush.msra.mxu0 0.0
          %479 = vmatpush.msra.mxu0 0.0
          %480 = vmatpush.msra.mxu0 0.0
          %481 = vmatpush.msra.mxu0 0.0
          %482 = vmatpush.msra.mxu0 0.0
          %483 = vmatpush.msra.mxu0 0.0
          %484 = vmatpush.msra.mxu0 0.0
          %485 = vmatpush.msra.mxu0 0.0
          %486 = vmatpush.msra.mxu0 0.0
          %487 = vmatpush.msra.mxu0 0.0
          %488 = vmatpush.msra.mxu0 0.0
          %489 = vmatpush.msra.mxu0 0.0
          %490 = vmatpush.msra.mxu0 %v421
          %491 = vmatpush.msra.mxu0 %v419
          %492 = vmatmul.f32.gmra.mxu0 %v474
          %v493 = vpop.f32.mrf.mxu0
          %v494 = vadd.f32 %v451, %v493
          %495 = vdwg.mxu0
          %496 = vmatpush.msra.mxu0 0.0
          %497 = vmatpush.msra.mxu0 0.0
          %498 = vmatpush.msra.mxu0 0.0
          %499 = vmatpush.msra.mxu0 0.0
          %500 = vmatpush.msra.mxu0 0.0
          %501 = vmatpush.msra.mxu0 0.0
          %502 = vmatpush.msra.mxu0 0.0
          %503 = vmatpush.msra.mxu0 0.0
          %504 = vmatpush.msra.mxu0 0.0
          %505 = vmatpush.msra.mxu0 0.0
          %506 = vmatpush.msra.mxu0 0.0
          %507 = vmatpush.msra.mxu0 0.0
          %508 = vmatpush.msra.mxu0 0.0
          %509 = vmatpush.msra.mxu0 0.0
          %510 = vmatpush.msra.mxu0 %v422
          %511 = vmatpush.msra.mxu0 %v420
          %512 = vmatmul.f32.gmra.mxu0 %v474
          %v513 = vpop.f32.mrf.mxu0
          %v514 = vadd.f32 %v471, %v513
          %515 = vdwg.mxu0
          %516 = vst [vmem:[#allocation2] sm:$0xff] %v494
          %517 = vst [vmem:[#allocation2 + $0x8] sm:$0xff] %v514
          %v518 = vld [vmem:[%s4] sm:$0xff]
          %v519 = vld [vmem:[%s4 + $0x8] sm:$0xff]
          %v520 = vld [vmem:[%s5] sm:$0xff]
          %v521 = vld [vmem:[%s5 + $0x8] sm:$0xff]
          %523 = vset.pattern.permute.xlu0 0
          %524 = vperm.xlu0 %523, %v520
          %v525 = vpop.permute.xlu0 %524
          %528 = vset.pattern.permute.xlu0 0
          %529 = vperm.xlu0 %528, %v521
          %v530 = vpop.permute.xlu0 %529
          %v533 = vsel %vm429, %v518, 0
          %v536 = vsel %vm429, %v519, 0
          %538 = vmatpush.msra.mxu0 0.0
          %539 = vmatpush.msra.mxu0 0.0
          %540 = vmatpush.msra.mxu0 0.0
          %541 = vmatpush.msra.mxu0 0.0
          %542 = vmatpush.msra.mxu0 0.0
          %543 = vmatpush.msra.mxu0 0.0
          %544 = vmatpush.msra.mxu0 0.0
          %545 = vmatpush.msra.mxu0 0.0
          %546 = vmatpush.msra.mxu0 0.0
          %547 = vmatpush.msra.mxu0 0.0
          %548 = vmatpush.msra.mxu0 0.0
          %549 = vmatpush.msra.mxu0 0.0
          %550 = vmatpush.msra.mxu0 0.0
          %551 = vmatpush.msra.mxu0 0.0
          %552 = vmatpush.msra.mxu0 %v425
          %553 = vmatpush.msra.mxu0 %v423
          %554 = vmatmul.f32.gmra.mxu0 %v533
          %v555 = vpop.f32.mrf.mxu0
          %v556 = vadd.f32 %v525, %v555
          %557 = vmatmul.f32.gmra.mxu0 %v536
          %v558 = vpop.f32.mrf.mxu0
          %v559 = vadd.f32 %v530, %v558
          %560 = vdwg.mxu0
          %561 = vmatpush.msra.mxu0 0.0
          %562 = vmatpush.msra.mxu0 0.0
          %563 = vmatpush.msra.mxu0 0.0
          %564 = vmatpush.msra.mxu0 0.0
          %565 = vmatpush.msra.mxu0 0.0
          %566 = vmatpush.msra.mxu0 0.0
          %567 = vmatpush.msra.mxu0 0.0
          %568 = vmatpush.msra.mxu0 0.0
          %569 = vmatpush.msra.mxu0 0.0
          %570 = vmatpush.msra.mxu0 0.0
          %571 = vmatpush.msra.mxu0 0.0
          %572 = vmatpush.msra.mxu0 0.0
          %573 = vmatpush.msra.mxu0 0.0
          %574 = vmatpush.msra.mxu0 0.0
          %575 = vmatpush.msra.mxu0 %v426
          %576 = vmatpush.msra.mxu0 %v424
          %577 = vmatmul.f32.gmra.mxu0 %v533
          %v578 = vpop.f32.mrf.mxu0
          %v579 = vadd.f32 %v525, %v578
          %580 = vmatmul.f32.gmra.mxu0 %v536
          %v581 = vpop.f32.mrf.mxu0
          %v582 = vadd.f32 %v530, %v581
          %583 = vdwg.mxu0
          %584 = vst [vmem:[#allocation3] sm:$0xff] %v556
          %585 = vst [vmem:[#allocation3 + $0x8] sm:$0xff] %v579
          %586 = vst [vmem:[#allocation3 + $0x10] sm:$0xff] %v559
          %587 = vst [vmem:[#allocation3 + $0x18] sm:$0xff] %v582
          %588 = vst [vmem:[#allocation4] sm:$0xff] 0.0
          %589 = vst [vmem:[#allocation4 + $0x8] sm:$0xff] 0.0
          %590 = vst [vmem:[#allocation4 + $0x10] sm:$0xff] 0.0
          %591 = vst [vmem:[#allocation4 + $0x18] sm:$0xff] 0.0
          %v592 = vlaneseq
          %vm593 = vcmp.ge.s32.totalorder %v592, 0
          %vm594 = vcmp.lt.s32.totalorder %v592, 256
          %vm595 = vmand %vm593, %vm594
          %596 = vst.msk [vmem:[#allocation5] sm:$0x3] %vm595, 0.0
        $region56: #{pct_forward.2} parent=51 // pred_fallthru
          _
        %s597 = smul.u32 %s30, 128
        %s598 = sshra.s32 %s597, 7
        %s599 = sand.u32 %s597, 127
        %s600 = smul.addr %s598, 8
        %s601 = scalar_lea.vmem [#allocation2], %s600
        %v602 = vld [vmem:[%s601] sm:$0xff]
        %v603 = vld [vmem:[#allocation2] sm:$0xff]
        %v604 = vld [vmem:[#allocation2 + $0x8] sm:$0xff]
        %605 = vxpose.xlu0.b32.start [1/16] %v602, 128
        %606 = vxpose.xlu0.b32.cont [2/16] 0.0, 128
        %607 = vxpose.xlu0.b32.cont [3/16] 0.0, 128
        %608 = vxpose.xlu0.b32.cont [4/16] 0.0, 128
        %609 = vxpose.xlu0.b32.cont [5/16] 0.0, 128
        %610 = vxpose.xlu0.b32.cont [6/16] 0.0, 128
        %611 = vxpose.xlu0.b32.cont [7/16] 0.0, 128
        %612 = vxpose.xlu0.b32.cont [8/16] 0.0, 128
        %613 = vxpose.xlu0.b32.cont [9/16] 0.0, 128
        %614 = vxpose.xlu0.b32.cont [10/16] 0.0, 128
        %615 = vxpose.xlu0.b32.cont [11/16] 0.0, 128
        %616 = vxpose.xlu0.b32.cont [12/16] 0.0, 128
        %617 = vxpose.xlu0.b32.cont [13/16] 0.0, 128
        %618 = vxpose.xlu0.b32.cont [14/16] 0.0, 128
        %619 = vxpose.xlu0.b32.cont [15/16] 0.0, 128
        %620 = vxpose.xlu0.b32.end [16/16] 0.0, 128
        %v621 = vpop.trf.xlu0
        %v622 = vpop.trf.xlu0
        %v623 = vpop.trf.xlu0
        %v624 = vpop.trf.xlu0
        %v625 = vpop.trf.xlu0
        %v626 = vpop.trf.xlu0
        %v627 = vpop.trf.xlu0
        %v628 = vpop.trf.xlu0
        %v629 = vpop.trf.xlu0
        %v630 = vpop.trf.xlu0
        %v631 = vpop.trf.xlu0
        %v632 = vpop.trf.xlu0
        %v633 = vpop.trf.xlu0
        %v634 = vpop.trf.xlu0
        %v635 = vpop.trf.xlu0
        %v636 = vpop.trf.xlu0
        %vm637 = vcmask 64512
        %v639 = vsel %vm637, %v621, 0
        %v642 = vsel %vm637, %v622, 0
        %v645 = vsel %vm637, %v623, 0
        %v648 = vsel %vm637, %v624, 0
        %v651 = vsel %vm637, %v625, 0
        %v654 = vsel %vm637, %v626, 0
        %v657 = vsel %vm637, %v627, 0
        %v660 = vsel %vm637, %v628, 0
        %v663 = vsel %vm637, %v629, 0
        %v666 = vsel %vm637, %v630, 0
        %v669 = vsel %vm637, %v631, 0
        %v672 = vsel %vm637, %v632, 0
        %v675 = vsel %vm637, %v633, 0
        %v678 = vsel %vm637, %v634, 0
        %v681 = vsel %vm637, %v635, 0
        %v684 = vsel %vm637, %v636, 0
        %686 = vmatpush.msra.mxu0 0.0
        %687 = vmatpush.msra.mxu0 0.0
        %688 = vmatpush.msra.mxu0 0.0
        %689 = vmatpush.msra.mxu0 0.0
        %690 = vmatpush.msra.mxu0 0.0
        %691 = vmatpush.msra.mxu0 0.0
        %692 = vmatpush.msra.mxu0 0.0
        %693 = vmatpush.msra.mxu0 0.0
        %694 = vmatpush.msra.mxu0 0.0
        %695 = vmatpush.msra.mxu0 0.0
        %696 = vmatpush.msra.mxu0 0.0
        %697 = vmatpush.msra.mxu0 0.0
        %698 = vmatpush.msra.mxu0 0.0
        %699 = vmatpush.msra.mxu0 0.0
        %700 = vmatpush.msra.mxu0 0.0
        %701 = vmatpush.msra.mxu0 %v603
        %702 = vmatmul.f32.gmra.mxu0 %v639
        %v703 = vpop.f32.mrf.mxu0
        %v704 = vadd.f32 0.0, %v703
        %705 = vmatmul.f32.gmra.mxu0 %v642
        %v706 = vpop.f32.mrf.mxu0
        %v707 = vadd.f32 0.0, %v706
        %708 = vmatmul.f32.gmra.mxu0 %v645
        %v709 = vpop.f32.mrf.mxu0
        %v710 = vadd.f32 0.0, %v709
        %711 = vmatmul.f32.gmra.mxu0 %v648
        %v712 = vpop.f32.mrf.mxu0
        %v713 = vadd.f32 0.0, %v712
        %714 = vmatmul.f32.gmra.mxu0 %v651
        %v715 = vpop.f32.mrf.mxu0
        %v716 = vadd.f32 0.0, %v715
        %717 = vmatmul.f32.gmra.mxu0 %v654
        %v718 = vpop.f32.mrf.mxu0
        %v719 = vadd.f32 0.0, %v718
        %720 = vmatmul.f32.gmra.mxu0 %v657
        %v721 = vpop.f32.mrf.mxu0
        %v722 = vadd.f32 0.0, %v721
        %723 = vmatmul.f32.gmra.mxu0 %v660
        %v724 = vpop.f32.mrf.mxu0
        %v725 = vadd.f32 0.0, %v724
        %726 = vmatmul.f32.gmra.mxu0 %v663
        %v727 = vpop.f32.mrf.mxu0
        %v728 = vadd.f32 0.0, %v727
        %729 = vmatmul.f32.gmra.mxu0 %v666
        %v730 = vpop.f32.mrf.mxu0
        %v731 = vadd.f32 0.0, %v730
        %732 = vmatmul.f32.gmra.mxu0 %v669
        %v733 = vpop.f32.mrf.mxu0
        %v734 = vadd.f32 0.0, %v733
        %735 = vmatmul.f32.gmra.mxu0 %v672
        %v736 = vpop.f32.mrf.mxu0
        %v737 = vadd.f32 0.0, %v736
        %738 = vmatmul.f32.gmra.mxu0 %v675
        %v739 = vpop.f32.mrf.mxu0
        %v740 = vadd.f32 0.0, %v739
        %741 = vmatmul.f32.gmra.mxu0 %v678
        %v742 = vpop.f32.mrf.mxu0
        %v743 = vadd.f32 0.0, %v742
        %744 = vmatmul.f32.gmra.mxu0 %v681
        %v745 = vpop.f32.mrf.mxu0
        %v746 = vadd.f32 0.0, %v745
        %747 = vmatmul.f32.gmra.mxu0 %v684
        %v748 = vpop.f32.mrf.mxu0
        %v749 = vadd.f32 0.0, %v748
        %750 = vdwg.mxu0
        %751 = vmatpush.msra.mxu0 0.0
        %752 = vmatpush.msra.mxu0 0.0
        %753 = vmatpush.msra.mxu0 0.0
        %754 = vmatpush.msra.mxu0 0.0
        %755 = vmatpush.msra.mxu0 0.0
        %756 = vmatpush.msra.mxu0 0.0
        %757 = vmatpush.msra.mxu0 0.0
        %758 = vmatpush.msra.mxu0 0.0
        %759 = vmatpush.msra.mxu0 0.0
        %760 = vmatpush.msra.mxu0 0.0
        %761 = vmatpush.msra.mxu0 0.0
        %762 = vmatpush.msra.mxu0 0.0
        %763 = vmatpush.msra.mxu0 0.0
        %764 = vmatpush.msra.mxu0 0.0
        %765 = vmatpush.msra.mxu0 0.0
        %766 = vmatpush.msra.mxu0 %v604
        %767 = vmatmul.f32.gmra.mxu0 %v639
        %v768 = vpop.f32.mrf.mxu0
        %v769 = vadd.f32 0.0, %v768
        %770 = vmatmul.f32.gmra.mxu0 %v642
        %v771 = vpop.f32.mrf.mxu0
        %v772 = vadd.f32 0.0, %v771
        %773 = vmatmul.f32.gmra.mxu0 %v645
        %v774 = vpop.f32.mrf.mxu0
        %v775 = vadd.f32 0.0, %v774
        %776 = vmatmul.f32.gmra.mxu0 %v648
        %v777 = vpop.f32.mrf.mxu0
        %v778 = vadd.f32 0.0, %v777
        %779 = vmatmul.f32.gmra.mxu0 %v651
        %v780 = vpop.f32.mrf.mxu0
        %v781 = vadd.f32 0.0, %v780
        %782 = vmatmul.f32.gmra.mxu0 %v654
        %v783 = vpop.f32.mrf.mxu0
        %v784 = vadd.f32 0.0, %v783
        %785 = vmatmul.f32.gmra.mxu0 %v657
        %v786 = vpop.f32.mrf.mxu0
        %v787 = vadd.f32 0.0, %v786
        %788 = vmatmul.f32.gmra.mxu0 %v660
        %v789 = vpop.f32.mrf.mxu0
        %v790 = vadd.f32 0.0, %v789
        %791 = vmatmul.f32.gmra.mxu0 %v663
        %v792 = vpop.f32.mrf.mxu0
        %v793 = vadd.f32 0.0, %v792
        %794 = vmatmul.f32.gmra.mxu0 %v666
        %v795 = vpop.f32.mrf.mxu0
        %v796 = vadd.f32 0.0, %v795
        %797 = vmatmul.f32.gmra.mxu0 %v669
        %v798 = vpop.f32.mrf.mxu0
        %v799 = vadd.f32 0.0, %v798
        %800 = vmatmul.f32.gmra.mxu0 %v672
        %v801 = vpop.f32.mrf.mxu0
        %v802 = vadd.f32 0.0, %v801
        %803 = vmatmul.f32.gmra.mxu0 %v675
        %v804 = vpop.f32.mrf.mxu0
        %v805 = vadd.f32 0.0, %v804
        %806 = vmatmul.f32.gmra.mxu0 %v678
        %v807 = vpop.f32.mrf.mxu0
        %v808 = vadd.f32 0.0, %v807
        %809 = vmatmul.f32.gmra.mxu0 %v681
        %v810 = vpop.f32.mrf.mxu0
        %v811 = vadd.f32 0.0, %v810
        %812 = vmatmul.f32.gmra.mxu0 %v684
        %v813 = vpop.f32.mrf.mxu0
        %v814 = vadd.f32 0.0, %v813
        %815 = vdwg.mxu0
        %v816 = vmax.f32 %v704, %v769
        %817 = vmax.xlane.f32.xlu0 %v816
        %v818 = vpop.xlane.xlu0 %817
        %v819 = vmax.f32 %v707, %v772
        %820 = vmax.xlane.f32.xlu0 %v819
        %v821 = vpop.xlane.xlu0 %820
        %v822 = vmax.f32 %v710, %v775
        %823 = vmax.xlane.f32.xlu0 %v822
        %v824 = vpop.xlane.xlu0 %823
        %v825 = vmax.f32 %v713, %v778
        %826 = vmax.xlane.f32.xlu0 %v825
        %v827 = vpop.xlane.xlu0 %826
        %v828 = vmax.f32 %v716, %v781
        %829 = vmax.xlane.f32.xlu0 %v828
        %v830 = vpop.xlane.xlu0 %829
        %v831 = vmax.f32 %v719, %v784
        %832 = vmax.xlane.f32.xlu0 %v831
        %v833 = vpop.xlane.xlu0 %832
        %v834 = vmax.f32 %v722, %v787
        %835 = vmax.xlane.f32.xlu0 %v834
        %v836 = vpop.xlane.xlu0 %835
        %v837 = vmax.f32 %v725, %v790
        %838 = vmax.xlane.f32.xlu0 %v837
        %v839 = vpop.xlane.xlu0 %838
        %v840 = vmax.f32 %v728, %v793
        %841 = vmax.xlane.f32.xlu0 %v840
        %v842 = vpop.xlane.xlu0 %841
        %v843 = vmax.f32 %v731, %v796
        %844 = vmax.xlane.f32.xlu0 %v843
        %v845 = vpop.xlane.xlu0 %844
        %v846 = vmax.f32 %v734, %v799
        %847 = vmax.xlane.f32.xlu0 %v846
        %v848 = vpop.xlane.xlu0 %847
        %v849 = vmax.f32 %v737, %v802
        %850 = vmax.xlane.f32.xlu0 %v849
        %v851 = vpop.xlane.xlu0 %850
        %v852 = vmax.f32 %v740, %v805
        %853 = vmax.xlane.f32.xlu0 %v852
        %v854 = vpop.xlane.xlu0 %853
        %v855 = vmax.f32 %v743, %v808
        %856 = vmax.xlane.f32.xlu0 %v855
        %v857 = vpop.xlane.xlu0 %856
        %v858 = vmax.f32 %v746, %v811
        %859 = vmax.xlane.f32.xlu0 %v858
        %v860 = vpop.xlane.xlu0 %859
        %v861 = vmax.f32 %v749, %v814
        %862 = vmax.xlane.f32.xlu0 %v861
        %v863 = vpop.xlane.xlu0 %862
        %v864 = vsub.f32 %v704, %v818
        %v865 = vsub.f32 %v769, %v818
        %v866 = vsub.f32 %v707, %v821
        %v867 = vsub.f32 %v772, %v821
        %v868 = vsub.f32 %v710, %v824
        %v869 = vsub.f32 %v775, %v824
        %v870 = vsub.f32 %v713, %v827
        %v871 = vsub.f32 %v778, %v827
        %v872 = vsub.f32 %v716, %v830
        %v873 = vsub.f32 %v781, %v830
        %v874 = vsub.f32 %v719, %v833
        %v875 = vsub.f32 %v784, %v833
        %v876 = vsub.f32 %v722, %v836
        %v877 = vsub.f32 %v787, %v836
        %v878 = vsub.f32 %v725, %v839
        %v879 = vsub.f32 %v790, %v839
        %v880 = vsub.f32 %v728, %v842
        %v881 = vsub.f32 %v793, %v842
        %v882 = vsub.f32 %v731, %v845
        %v883 = vsub.f32 %v796, %v845
        %v884 = vsub.f32 %v734, %v848
        %v885 = vsub.f32 %v799, %v848
        %v886 = vsub.f32 %v737, %v851
        %v887 = vsub.f32 %v802, %v851
        %v888 = vsub.f32 %v740, %v854
        %v889 = vsub.f32 %v805, %v854
        %v890 = vsub.f32 %v743, %v857
        %v891 = vsub.f32 %v808, %v857
        %v892 = vsub.f32 %v746, %v860
        %v893 = vsub.f32 %v811, %v860
        %v894 = vsub.f32 %v749, %v863
        %v895 = vsub.f32 %v814, %v863
        %v896 = vmul.f32 %v864, 1.442695
        %v897 = vpow.pop %v896
        %v898 = vmul.f32 %v865, 1.442695
        %v899 = vpow.pop %v898
        %v900 = vmul.f32 %v866, 1.442695
        %v901 = vpow.pop %v900
        %v902 = vmul.f32 %v867, 1.442695
        %v903 = vpow.pop %v902
        %v904 = vmul.f32 %v868, 1.442695
        %v905 = vpow.pop %v904
        %v906 = vmul.f32 %v869, 1.442695
        %v907 = vpow.pop %v906
        %v908 = vmul.f32 %v870, 1.442695
        %v909 = vpow.pop %v908
        %v910 = vmul.f32 %v871, 1.442695
        %v911 = vpow.pop %v910
        %v912 = vmul.f32 %v872, 1.442695
        %v913 = vpow.pop %v912
        %v914 = vmul.f32 %v873, 1.442695
        %v915 = vpow.pop %v914
        %v916 = vmul.f32 %v874, 1.442695
        %v917 = vpow.pop %v916
        %v918 = vmul.f32 %v875, 1.442695
        %v919 = vpow.pop %v918
        %v920 = vmul.f32 %v876, 1.442695
        %v921 = vpow.pop %v920
        %v922 = vmul.f32 %v877, 1.442695
        %v923 = vpow.pop %v922
        %v924 = vmul.f32 %v878, 1.442695
        %v925 = vpow.pop %v924
        %v926 = vmul.f32 %v879, 1.442695
        %v927 = vpow.pop %v926
        %v928 = vmul.f32 %v880, 1.442695
        %v929 = vpow.pop %v928
        %v930 = vmul.f32 %v881, 1.442695
        %v931 = vpow.pop %v930
        %v932 = vmul.f32 %v882, 1.442695
        %v933 = vpow.pop %v932
        %v934 = vmul.f32 %v883, 1.442695
        %v935 = vpow.pop %v934
        %v936 = vmul.f32 %v884, 1.442695
        %v937 = vpow.pop %v936
        %v938 = vmul.f32 %v885, 1.442695
        %v939 = vpow.pop %v938
        %v940 = vmul.f32 %v886, 1.442695
        %v941 = vpow.pop %v940
        %v942 = vmul.f32 %v887, 1.442695
        %v943 = vpow.pop %v942
        %v944 = vmul.f32 %v888, 1.442695
        %v945 = vpow.pop %v944
        %v946 = vmul.f32 %v889, 1.442695
        %v947 = vpow.pop %v946
        %v948 = vmul.f32 %v890, 1.442695
        %v949 = vpow.pop %v948
        %v950 = vmul.f32 %v891, 1.442695
        %v951 = vpow.pop %v950
        %v952 = vmul.f32 %v892, 1.442695
        %v953 = vpow.pop %v952
        %v954 = vmul.f32 %v893, 1.442695
        %v955 = vpow.pop %v954
        %v956 = vmul.f32 %v894, 1.442695
        %v957 = vpow.pop %v956
        %v958 = vmul.f32 %v895, 1.442695
        %v959 = vpow.pop %v958
        %v960 = vadd.f32 %v897, %v899
        %961 = vadd.xlane.f32.xlu0 %v960
        %v962 = vpop.xlane.xlu0 %961
        %v963 = vadd.f32 %v901, %v903
        %964 = vadd.xlane.f32.xlu0 %v963
        %v965 = vpop.xlane.xlu0 %964
        %v966 = vadd.f32 %v905, %v907
        %967 = vadd.xlane.f32.xlu0 %v966
        %v968 = vpop.xlane.xlu0 %967
        %v969 = vadd.f32 %v909, %v911
        %970 = vadd.xlane.f32.xlu0 %v969
        %v971 = vpop.xlane.xlu0 %970
        %v972 = vadd.f32 %v913, %v915
        %973 = vadd.xlane.f32.xlu0 %v972
        %v974 = vpop.xlane.xlu0 %973
        %v975 = vadd.f32 %v917, %v919
        %976 = vadd.xlane.f32.xlu0 %v975
        %v977 = vpop.xlane.xlu0 %976
        %v978 = vadd.f32 %v921, %v923
        %979 = vadd.xlane.f32.xlu0 %v978
        %v980 = vpop.xlane.xlu0 %979
        %v981 = vadd.f32 %v925, %v927
        %982 = vadd.xlane.f32.xlu0 %v981
        %v983 = vpop.xlane.xlu0 %982
        %v984 = vadd.f32 %v929, %v931
        %985 = vadd.xlane.f32.xlu0 %v984
        %v986 = vpop.xlane.xlu0 %985
        %v987 = vadd.f32 %v933, %v935
        %988 = vadd.xlane.f32.xlu0 %v987
        %v989 = vpop.xlane.xlu0 %988
        %v990 = vadd.f32 %v937, %v939
        %991 = vadd.xlane.f32.xlu0 %v990
        %v992 = vpop.xlane.xlu0 %991
        %v993 = vadd.f32 %v941, %v943
        %994 = vadd.xlane.f32.xlu0 %v993
        %v995 = vpop.xlane.xlu0 %994
        %v996 = vadd.f32 %v945, %v947
        %997 = vadd.xlane.f32.xlu0 %v996
        %v998 = vpop.xlane.xlu0 %997
        %v999 = vadd.f32 %v949, %v951
        %1000 = vadd.xlane.f32.xlu0 %v999
        %v1001 = vpop.xlane.xlu0 %1000
        %v1002 = vadd.f32 %v953, %v955
        %1003 = vadd.xlane.f32.xlu0 %v1002
        %v1004 = vpop.xlane.xlu0 %1003
        %v1005 = vadd.f32 %v957, %v959
        %1006 = vadd.xlane.f32.xlu0 %v1005
        %v1007 = vpop.xlane.xlu0 %1006
        %v1008 = vrcp.pop %v962
        %v1009 = vrcp.pop %v965
        %v1010 = vrcp.pop %v968
        %v1011 = vrcp.pop %v971
        %v1012 = vrcp.pop %v974
        %v1013 = vrcp.pop %v977
        %v1014 = vrcp.pop %v980
        %v1015 = vrcp.pop %v983
        %v1016 = vrcp.pop %v986
        %v1017 = vrcp.pop %v989
        %v1018 = vrcp.pop %v992
        %v1019 = vrcp.pop %v995
        %v1020 = vrcp.pop %v998
        %v1021 = vrcp.pop %v1001
        %v1022 = vrcp.pop %v1004
        %v1023 = vrcp.pop %v1007
        %v1024 = vmul.f32 %v897, %v1008
        %v1025 = vmul.f32 %v899, %v1008
        %v1026 = vmul.f32 %v901, %v1009
        %v1027 = vmul.f32 %v903, %v1009
        %v1028 = vmul.f32 %v905, %v1010
        %v1029 = vmul.f32 %v907, %v1010
        %v1030 = vmul.f32 %v909, %v1011
        %v1031 = vmul.f32 %v911, %v1011
        %v1032 = vmul.f32 %v913, %v1012
        %v1033 = vmul.f32 %v915, %v1012
        %v1034 = vmul.f32 %v917, %v1013
        %v1035 = vmul.f32 %v919, %v1013
        %v1036 = vmul.f32 %v921, %v1014
        %v1037 = vmul.f32 %v923, %v1014
        %v1038 = vmul.f32 %v925, %v1015
        %v1039 = vmul.f32 %v927, %v1015
        %v1040 = vmul.f32 %v929, %v1016
        %v1041 = vmul.f32 %v931, %v1016
        %v1042 = vmul.f32 %v933, %v1017
        %v1043 = vmul.f32 %v935, %v1017
        %v1044 = vmul.f32 %v937, %v1018
        %v1045 = vmul.f32 %v939, %v1018
        %v1046 = vmul.f32 %v941, %v1019
        %v1047 = vmul.f32 %v943, %v1019
        %v1048 = vmul.f32 %v945, %v1020
        %v1049 = vmul.f32 %v947, %v1020
        %v1050 = vmul.f32 %v949, %v1021
        %v1051 = vmul.f32 %v951, %v1021
        %v1052 = vmul.f32 %v953, %v1022
        %v1053 = vmul.f32 %v955, %v1022
        %v1054 = vmul.f32 %v957, %v1023
        %v1055 = vmul.f32 %v959, %v1023
        %v1056 = vld [vmem:[#allocation5] sm:$0x3]
        %v1057 = vadd.f32 %v1024, %v1026
        %v1058 = vadd.f32 %v1057, %v1028
        %v1059 = vadd.f32 %v1058, %v1030
        %v1060 = vadd.f32 %v1059, %v1032
        %v1061 = vadd.f32 %v1060, %v1034
        %v1062 = vadd.f32 %v1061, %v1036
        %v1063 = vadd.f32 %v1062, %v1038
        %v1064 = vadd.f32 %v1063, %v1040
        %v1065 = vadd.f32 %v1064, %v1042
        %v1066 = vadd.f32 %v1065, %v1044
        %v1067 = vadd.f32 %v1066, %v1046
        %v1068 = vadd.f32 %v1067, %v1048
        %v1069 = vadd.f32 %v1068, %v1050
        %v1070 = vadd.f32 %v1069, %v1052
        %v1071 = vadd.f32 %v1070, %v1054
        %v1072 = vrot.slane %v1071, 4
        %v1073 = vadd.f32 %v1071, %v1072
        %v1074 = vrot.slane %v1073, 2
        %v1075 = vadd.f32 %v1073, %v1074
        %v1076 = vrot.slane %v1075, 1
        %v1077 = vadd.f32 %v1075, %v1076
        %v1078 = vadd.f32 %v1025, %v1027
        %v1079 = vadd.f32 %v1078, %v1029
        %v1080 = vadd.f32 %v1079, %v1031
        %v1081 = vadd.f32 %v1080, %v1033
        %v1082 = vadd.f32 %v1081, %v1035
        %v1083 = vadd.f32 %v1082, %v1037
        %v1084 = vadd.f32 %v1083, %v1039
        %v1085 = vadd.f32 %v1084, %v1041
        %v1086 = vadd.f32 %v1085, %v1043
        %v1087 = vadd.f32 %v1086, %v1045
        %v1088 = vadd.f32 %v1087, %v1047
        %v1089 = vadd.f32 %v1088, %v1049
        %v1090 = vadd.f32 %v1089, %v1051
        %v1091 = vadd.f32 %v1090, %v1053
        %v1092 = vadd.f32 %v1091, %v1055
        %v1093 = vrot.slane %v1092, 4
        %v1094 = vadd.f32 %v1092, %v1093
        %v1095 = vrot.slane %v1094, 2
        %v1096 = vadd.f32 %v1094, %v1095
        %v1097 = vrot.slane %v1096, 1
        %v1098 = vadd.f32 %v1096, %v1097
        %v1101 = vrot.slane %v1098, 7
        %vm1102 = vcmask 1040384
        %v1103 = vsel %vm1102, %v1077, %v1101
        %v1105 = vadd.f32 %v1056, %v1103
        %v1106 = vlaneseq
        %vm1107 = vcmp.ge.s32.totalorder %v1106, 0
        %vm1108 = vcmp.lt.s32.totalorder %v1106, 256
        %vm1109 = vmand %vm1107, %vm1108
        %1110 = vst.msk [vmem:[#allocation5] sm:$0x3] %vm1109, %v1105
        %s1111 = smul.addr %s598, 8
        %s1112 = scalar_lea.vmem [#allocation3], %s1111
        %v1113 = vld [vmem:[%s1112] sm:$0xff]
        %v1114 = vld [vmem:[%s1112 + $0x10] sm:$0xff]
        %v1115 = vld [vmem:[#allocation4] sm:$0xff]
        %v1116 = vld [vmem:[#allocation4 + $0x8] sm:$0xff]
        %v1117 = vld [vmem:[#allocation4 + $0x10] sm:$0xff]
        %v1118 = vld [vmem:[#allocation4 + $0x18] sm:$0xff]
        %1119 = vmatpush.msra.mxu0 %v1054
        %1120 = vmatpush.msra.mxu0 %v1052
        %1121 = vmatpush.msra.mxu0 %v1050
        %1122 = vmatpush.msra.mxu0 %v1048
        %1123 = vmatpush.msra.mxu0 %v1046
        %1124 = vmatpush.msra.mxu0 %v1044
        %1125 = vmatpush.msra.mxu0 %v1042
        %1126 = vmatpush.msra.mxu0 %v1040
        %1127 = vmatpush.msra.mxu0 %v1038
        %1128 = vmatpush.msra.mxu0 %v1036
        %1129 = vmatpush.msra.mxu0 %v1034
        %1130 = vmatpush.msra.mxu0 %v1032
        %1131 = vmatpush.msra.mxu0 %v1030
        %1132 = vmatpush.msra.mxu0 %v1028
        %1133 = vmatpush.msra.mxu0 %v1026
        %1134 = vmatpush.msra.mxu0 %v1024
        %1135 = vmatmul.f32.gmra.mxu0 %v1113
        %v1136 = vpop.f32.mrf.mxu0
        %v1137 = vadd.f32 0.0, %v1136
        %1138 = vmatmul.f32.gmra.mxu0 %v1114
        %v1139 = vpop.f32.mrf.mxu0
        %v1140 = vadd.f32 0.0, %v1139
        %1141 = vdwg.mxu0
        %1142 = vmatpush.msra.mxu0 %v1055
        %1143 = vmatpush.msra.mxu0 %v1053
        %1144 = vmatpush.msra.mxu0 %v1051
        %1145 = vmatpush.msra.mxu0 %v1049
        %1146 = vmatpush.msra.mxu0 %v1047
        %1147 = vmatpush.msra.mxu0 %v1045
        %1148 = vmatpush.msra.mxu0 %v1043
        %1149 = vmatpush.msra.mxu0 %v1041
        %1150 = vmatpush.msra.mxu0 %v1039
        %1151 = vmatpush.msra.mxu0 %v1037
        %1152 = vmatpush.msra.mxu0 %v1035
        %1153 = vmatpush.msra.mxu0 %v1033
        %1154 = vmatpush.msra.mxu0 %v1031
        %1155 = vmatpush.msra.mxu0 %v1029
        %1156 = vmatpush.msra.mxu0 %v1027
        %1157 = vmatpush.msra.mxu0 %v1025
        %1158 = vmatmul.f32.gmra.mxu0 %v1113
        %v1159 = vpop.f32.mrf.mxu0
        %v1160 = vadd.f32 0.0, %v1159
        %1161 = vmatmul.f32.gmra.mxu0 %v1114
        %v1162 = vpop.f32.mrf.mxu0
        %v1163 = vadd.f32 0.0, %v1162
        %1164 = vdwg.mxu0
        %v1165 = vadd.f32 %v1115, %v1137
        %v1166 = vadd.f32 %v1116, %v1160
        %v1167 = vadd.f32 %v1117, %v1140
        %v1168 = vadd.f32 %v1118, %v1163
        %1169 = vst [vmem:[#allocation4] sm:$0xff] %v1165
        %1170 = vst [vmem:[#allocation4 + $0x8] sm:$0xff] %v1166
        %1171 = vst [vmem:[#allocation4 + $0x10] sm:$0xff] %v1167
        %1172 = vst [vmem:[#allocation4 + $0x18] sm:$0xff] %v1168
        %p1173 = scmp.eq.s32.totalorder %s30, 1
        // Predicated region
        $region57: #{pct_forward.2} parent=51 // pred_check
          %p1174 = pneg %p1173
        $region58: #{pct_forward.2} parent=51 // pred_check_branch
          %1176 = sbr.rel (%p1174) target = $region60
        $region59: #{pct_forward.2} parent=51 // pred_region
          %v1177 = vld [vmem:[%s404] sm:$0xff]
          %v1178 = vld [vmem:[%s404 + $0x8] sm:$0xff]
          %v1179 = vld [vmem:[%s404 + $0x10] sm:$0xff]
          %v1180 = vld [vmem:[%s404 + $0x18] sm:$0xff]
          %v1181 = vld [vmem:[#allocation4] sm:$0xff]
          %v1182 = vld [vmem:[#allocation4 + $0x8] sm:$0xff]
          %v1183 = vld [vmem:[#allocation4 + $0x10] sm:$0xff]
          %v1184 = vld [vmem:[#allocation4 + $0x18] sm:$0xff]
          %v1185 = vld [vmem:[#allocation5] sm:$0x3]
          %v1186 = vadd.f32 %v1185, 1e-09
          %v1187 = vrcp.pop %v1186
          %v1189 = vperm.slane %v1187, 0
          %v1190 = vperm.slane %v1187, 1
          %v1193 = vmul.f32 %v1181, %v1189
          %v1194 = vmul.f32 %v1182, %v1190
          %v1195 = vmul.f32 %v1183, %v1189
          %v1196 = vmul.f32 %v1184, %v1190
          %v1197 = vsub.f32 %v1177, %v1193
          %v1198 = vsub.f32 %v1178, %v1194
          %v1199 = vsub.f32 %v1179, %v1195
          %v1200 = vsub.f32 %v1180, %v1196
          %v1201 = vld [vmem:[%s6] sm:$0xff]
          %v1202 = vld [vmem:[%s6 + $0x8] sm:$0xff]
          %v1203 = vld [vmem:[%s7] sm:$0xff]
          %v1204 = vld [vmem:[%s7 + $0x8] sm:$0xff]
          %1206 = vset.pattern.permute.xlu0 0
          %1207 = vperm.xlu0 %1206, %v1203
          %v1208 = vpop.permute.xlu0 %1207
          %1211 = vset.pattern.permute.xlu0 0
          %1212 = vperm.xlu0 %1211, %v1204
          %v1213 = vpop.permute.xlu0 %1212
          %vm1215 = vcmask 130048
          %v1217 = vsel %vm1215, %v1201, 0
          %v1220 = vsel %vm1215, %v1202, 0
          %1222 = vmatpush.msra.mxu0 0.0
          %1223 = vmatpush.msra.mxu0 0.0
          %1224 = vmatpush.msra.mxu0 0.0
          %1225 = vmatpush.msra.mxu0 0.0
          %1226 = vmatpush.msra.mxu0 0.0
          %1227 = vmatpush.msra.mxu0 0.0
          %1228 = vmatpush.msra.mxu0 0.0
          %1229 = vmatpush.msra.mxu0 0.0
          %1230 = vmatpush.msra.mxu0 0.0
          %1231 = vmatpush.msra.mxu0 0.0
          %1232 = vmatpush.msra.mxu0 0.0
          %1233 = vmatpush.msra.mxu0 0.0
          %1234 = vmatpush.msra.mxu0 0.0
          %1235 = vmatpush.msra.mxu0 0.0
          %1236 = vmatpush.msra.mxu0 %v1199
          %1237 = vmatpush.msra.mxu0 %v1197
          %1238 = vmatmul.f32.gmra.mxu0 %v1217
          %v1239 = vpop.f32.mrf.mxu0
          %v1240 = vadd.f32 %v1208, %v1239
          %1241 = vmatmul.f32.gmra.mxu0 %v1220
          %v1242 = vpop.f32.mrf.mxu0
          %v1243 = vadd.f32 %v1213, %v1242
          %1244 = vdwg.mxu0
          %1245 = vmatpush.msra.mxu0 0.0
          %1246 = vmatpush.msra.mxu0 0.0
          %1247 = vmatpush.msra.mxu0 0.0
          %1248 = vmatpush.msra.mxu0 0.0
          %1249 = vmatpush.msra.mxu0 0.0
          %1250 = vmatpush.msra.mxu0 0.0
          %1251 = vmatpush.msra.mxu0 0.0
          %1252 = vmatpush.msra.mxu0 0.0
          %1253 = vmatpush.msra.mxu0 0.0
          %1254 = vmatpush.msra.mxu0 0.0
          %1255 = vmatpush.msra.mxu0 0.0
          %1256 = vmatpush.msra.mxu0 0.0
          %1257 = vmatpush.msra.mxu0 0.0
          %1258 = vmatpush.msra.mxu0 0.0
          %1259 = vmatpush.msra.mxu0 %v1200
          %1260 = vmatpush.msra.mxu0 %v1198
          %1261 = vmatmul.f32.gmra.mxu0 %v1217
          %v1262 = vpop.f32.mrf.mxu0
          %v1263 = vadd.f32 %v1208, %v1262
          %1264 = vmatmul.f32.gmra.mxu0 %v1220
          %v1265 = vpop.f32.mrf.mxu0
          %v1266 = vadd.f32 %v1213, %v1265
          %1267 = vdwg.mxu0
          %1268 = vst [vmem:[%s380] sm:$0xff] %v1240
          %1269 = vst [vmem:[%s380 + $0x8] sm:$0xff] %v1263
          %1270 = vst [vmem:[%s380 + $0x10] sm:$0xff] %v1243
          %1271 = vst [vmem:[%s380 + $0x18] sm:$0xff] %v1266
          %v1272 = vadd.f32 %v1240, %v1263
          %1273 = vadd.xlane.f32.xlu0 %v1272
          %v1274 = vpop.xlane.xlu0 %1273
          %v1275 = vadd.f32 %v1243, %v1266
          %1276 = vadd.xlane.f32.xlu0 %v1275
          %v1277 = vpop.xlane.xlu0 %1276
          %vm1278 = vcmask 7168
          %1279 = vst.msk [vmem:[%s409] sm:$0xff] %vm1278, %v1274
          %1280 = vst.msk [vmem:[%s409 + $0x8] sm:$0xff] %vm1278, %v1277
          %v1281 = vmul.f32 %v1240, %v1240
          %v1282 = vmul.f32 %v1263, %v1263
          %v1283 = vmul.f32 %v1243, %v1243
          %v1284 = vmul.f32 %v1266, %v1266
          %v1285 = vadd.f32 %v1281, %v1282
          %1286 = vadd.xlane.f32.xlu0 %v1285
          %v1287 = vpop.xlane.xlu0 %1286
          %v1288 = vadd.f32 %v1283, %v1284
          %1289 = vadd.xlane.f32.xlu0 %v1288
          %v1290 = vpop.xlane.xlu0 %1289
          %1291 = vst.msk [vmem:[%s414] sm:$0xff] %vm1278, %v1287
          %1292 = vst.msk [vmem:[%s414 + $0x8] sm:$0xff] %vm1278, %v1290
        $region60: #{pct_forward.2} parent=51 // pred_fallthru
          _
        %s1293 = sand.u32 %s223, 1
        %s1294 = scalar_lea.sflag [#allocation7], %s1293
        %s1295 = sand.u32 %s223, 1
        %s1296 = smul.addr %s1295, 32
        %s1297 = scalar_lea.vmem [#allocation6], %s1296
        %p1298 = scmp.lt.s32.totalorder %s29, 1
        %s1299 = scalar_select %p1298, %s29, 1
        %s1300 = smul.addr %s1299, 2
        %s1301 = smul.addr %s1300, 8
        %s1302 = scalar_lea.vmem %s9, %s1301
        %p1303 = scmp.lt.s32.totalorder %s29, 1
        %s1304 = scalar_select %p1303, %s29, 1
        %s1305 = smul.addr %s1304, 2
        %s1306 = smul.addr %s1305, 8
        %s1307 = scalar_lea.vmem %s10, %s1306
        // Predicated region
        $region61: #{pct_forward.2} parent=51 // pred_check
          %p1308 = pneg %p233
        $region62: #{pct_forward.2} parent=51 // pred_check_branch
          %1310 = sbr.rel (%p1308) target = $region64
        $region63: #{pct_forward.2} parent=51 // pred_region
          %1312 = vsyncadd %s1294, 0
          %s1313 = smul.addr %s29, 4
          %s1314 = smul.addr %s1313, 8
          %s1315 = scalar_lea.hbm %s8, %s1314
          %s1316 = sshll.u32 %s1297, 4
          %s1317 = int_to_ptr.vmem [resolvable:$true] %s1316
          %s1318 = sshll.u32 %s1315, 4
          %s1319 = int_to_ptr.hbm [resolvable:$true] %s1318
          %1324 = dma.vmem_to_hbm [thread:$0]  %s1317, 512, %s1319, %s1294, 256, 256, 16
        $region64: #{pct_forward.2} parent=51 // pred_fallthru
          _
        // Predicated region
        $region65: #{pct_forward.2} parent=51 // pred_check
          %p1325 = pneg %p259
        $region66: #{pct_forward.2} parent=51 // pred_check_branch
          %1327 = sbr.rel (%p1325) target = $region68
        $region67: #{pct_forward.2} parent=51 // pred_region
          _
        $region68: #{pct_forward.2} parent=51 // pred_fallthru
          _
        // Predicated region
        $region69: #{pct_forward.2} parent=51 // pred_check
          %p1328 = pneg %p285
        $region70: #{pct_forward.2} parent=51 // pred_check_branch
          %1330 = sbr.rel (%p1328) target = $region72
        $region71: #{pct_forward.2} parent=51 // pred_region
          _
        $region72: #{pct_forward.2} parent=51 // pred_fallthru
          _
      $region52: #{pct_forward.2} parent=5 // pred_fallthru
        _
      %p1331 = scmp.le.s32.totalorder 2, %s20
      // Predicated region
      $region73: #{pct_forward.2} parent=5 // pred_check
        %p1332 = pneg %p1331
      $region74: #{pct_forward.2} parent=5 // pred_check_branch
        %1334 = sbr.rel (%p1332) target = $region76
      $region75: #{pct_forward.2} parent=5 // pred_region
        %s1335 = ssub.s32 %s20, 2
        // Predicated region
        $region77: #{pct_forward.2} parent=75 // pred_check
          %p1336 = pneg %p239
        $region78: #{pct_forward.2} parent=75 // pred_check_branch
          %1338 = sbr.rel (%p1336) target = $region80
        $region79: #{pct_forward.2} parent=75 // pred_region
          %s1339 = sand.u32 %s224, 1
          %s1340 = scalar_lea.sflag [#allocation7], %s1339
          %s1341 = sand.u32 %s224, 1
          %s1342 = smul.addr %s1341, 32
          %s1343 = scalar_lea.vmem [#allocation6], %s1342
          %1345 = dma.done %s1340, 512
        $region80: #{pct_forward.2} parent=75 // pred_fallthru
          _
        // Predicated region
        $region81: #{pct_forward.2} parent=75 // pred_check
          %p1346 = pneg %p265
        $region82: #{pct_forward.2} parent=75 // pred_check_branch
          %1348 = sbr.rel (%p1346) target = $region84
        $region83: #{pct_forward.2} parent=75 // pred_region
          %p1349 = scmp.lt.s32.totalorder %s31, 1
          %s1350 = scalar_select %p1349, %s31, 1
          %s1351 = smul.addr %s1350, 2
          %s1352 = smul.addr %s1351, 8
          %s1353 = scalar_lea.vmem %s9, %s1352
        $region84: #{pct_forward.2} parent=75 // pred_fallthru
          _
        // Predicated region
        $region85: #{pct_forward.2} parent=75 // pred_check
          %p1354 = pneg %p291
        $region86: #{pct_forward.2} parent=75 // pred_check_branch
          %1356 = sbr.rel (%p1354) target = $region88
        $region87: #{pct_forward.2} parent=75 // pred_region
          %p1357 = scmp.lt.s32.totalorder %s31, 1
          %s1358 = scalar_select %p1357, %s31, 1
          %s1359 = smul.addr %s1358, 2
          %s1360 = smul.addr %s1359, 8
          %s1361 = scalar_lea.vmem %s10, %s1360
        $region88: #{pct_forward.2} parent=75 // pred_fallthru
          _
      $region76: #{pct_forward.2} parent=5 // pred_fallthru
        _
    $region6: #{pct_forward.2} parent=1 // loop_footer
      %s24 = sadd.s32 1, %s20
    $region7: #{pct_forward.2} parent=1 // loop_footer_branch
      %19 = sbr.rel target = $region3
    $region8: #{pct_forward.2} parent=1 // loop_exit
      _
    %1362 = vsyncpa [#allocation7], 1
    %s1363 = scalar_lea.sflag [#allocation7], 1
    %1364 = vsyncpa %s1363, 1

</llo_original>
